<compile_context>
chip_gen: v5e
topology: v5e:2x2
jax: 0.10.0
libtpu: 0.0.40
codegen_flags: <defaults>
</compile_context>

<pallas_src>
import numpy as np
import jax
import jax.numpy as jnp
from jax import lax
from jax.experimental import pallas as pl
from jax.experimental.pallas import tpu as pltpu

# ------------------------- configuration (small) ---------------------------
VOCAB = 256
HIDDEN = 128
PAD_ID = -1

NUM_PREFERENCE_PAIRS = 2
BATCH_SIZE = 2
NUM_CANDIDATE_RESPONSES = 4
NUM_EVALS_TO_AVERAGE = 3
PREFERENCE_MAX_SEQ_LEN = 16
GENERATE_REWARD_MAX_SEQ_LEN = 8
GEN_TEMPERATURE = 0.7
GEN_NUCLEUS_P = 0.9
EVAL_TEMPERATURE = 0.7
EVAL_NUCLEUS_P = 0.9

ROW_BLOCK = 8          # rows per grid step (sublane multiple; v7x shards these)
N_BISECT = 30          # binary-search iterations for the nucleus threshold


# --------------------- fused decode-loop Pallas kernel ---------------------

def _make_decode_kernel(RB, L, temperature, nucleus_p):
    """Whole autoregressive nucleus-sampling loop for RB rows of length L."""
    inv_t = float(1.0 / max(temperature, 1e-10))
    p_thres = float(nucleus_p)

    def kernel(minstart_ref, starts_ref, tok_ref, gum_ref, emb_ref, w_ref,
               out_ref):
        tok = tok_ref[...]                         # (RB, L) int32 prompt + PAD
        starts = starts_ref[...]                   # (RB, 1) int32 per-row start

        iota_rv = lax.broadcasted_iota(jnp.int32, (RB, VOCAB), 1)
        col_iota = lax.broadcasted_iota(jnp.int32, (RB, L), 1)

        # bag-of-words counts over the non-PAD prompt tokens (mean-pool model)
        counts0 = jnp.zeros((RB, VOCAB), jnp.float32)
        for s in range(L):
            ts = tok[:, s:s + 1]                                  # (RB, 1)
            counts0 = counts0 + ((iota_rv == ts) & (ts != PAD_ID)
                                 ).astype(jnp.float32)

        def step(t, carry):
            counts, gen = carry                                   # in-register

            n = jnp.maximum(jnp.sum(counts, axis=-1, keepdims=True), 1.0)
            hidden = jnp.dot(counts.astype(jnp.bfloat16), emb_ref[...],
                             preferred_element_type=jnp.float32) / n
            logits = jnp.dot(hidden.astype(jnp.bfloat16), w_ref[...],
                             preferred_element_type=jnp.float32)  # (RB, V)

            # nucleus (top-p) keep mask on raw logits, row-vectorized:
            # binary-search tau s.t. mass{logit_k > tau} <= p * total,
            # then keep j <=> logit_j > lo (boundary token always kept).
            mx = jnp.max(logits, axis=-1, keepdims=True)
            e = jnp.exp(logits - mx)                              # (RB, V)
            thres = p_thres * jnp.sum(e, axis=-1, keepdims=True)  # (RB, 1)

            lo = jnp.min(logits, axis=-1, keepdims=True) - 1.0
            hi = mx
            for _ in range(N_BISECT):
                mid = 0.5 * (lo + hi)
                mass = jnp.sum(jnp.where(logits > mid, e, 0.0),
                               axis=-1, keepdims=True)
                above = mass > thres
                lo = jnp.where(above, mid, lo)
                hi = jnp.where(above, hi, mid)
            keep = logits > lo                                    # (RB, V) bool

            # gumbel-max sampling at temperature (noise precomputed outside)
            gum = gum_ref[t]                                      # (RB, V) f32
            scores = jnp.where(keep, logits * inv_t + gum, -1e30)
            m = jnp.max(scores, axis=-1, keepdims=True)
            ids = jnp.min(jnp.where(scores >= m, iota_rv, VOCAB),
                          axis=-1, keepdims=True)                 # (RB, 1)

            # rows whose prompt hasn't ended yet keep their prompt token
            active = t >= starts                                  # (RB, 1)
            gen = jnp.where((col_iota == t) & active, ids, gen)
            counts = counts + jnp.where(active & (iota_rv == ids), 1.0, 0.0)
            return counts, gen

        _, gen = lax.fori_loop(minstart_ref[0], L, step, (counts0, tok))
        out_ref[...] = gen                                        # single store

    return kernel


_DECODE_CACHE = {}


def _decode_fn(R_pad, L, temperature, nucleus_p):
    key = (int(R_pad), int(L),
           round(float(temperature), 6), round(float(nucleus_p), 6))
    if key not in _DECODE_CACHE:
        kernel = _make_decode_kernel(ROW_BLOCK, L, temperature, nucleus_p)
        n_blocks = R_pad // ROW_BLOCK
        fn = pl.pallas_call(
            kernel,
            out_shape=jax.ShapeDtypeStruct((R_pad, L), jnp.int32),
            grid=(n_blocks,),
            in_specs=[
                pl.BlockSpec(memory_space=pltpu.MemorySpace.SMEM),  # min start
                pl.BlockSpec((ROW_BLOCK, 1), lambda i: (i, 0)),     # row starts
                pl.BlockSpec((ROW_BLOCK, L), lambda i: (i, 0)),     # tokens
                pl.BlockSpec((L, ROW_BLOCK, VOCAB),
                             lambda i: (0, i, 0)),                  # gumbel
                pl.BlockSpec((VOCAB, HIDDEN), lambda i: (0, 0)),    # embed bf16
                pl.BlockSpec((HIDDEN, VOCAB), lambda i: (0, 0)),    # head  bf16
            ],
            out_specs=pl.BlockSpec((ROW_BLOCK, L), lambda i: (i, 0)),
            compiler_params=pltpu.CompilerParams(
                dimension_semantics=("parallel",)),                 # v7x 2-TC
        )
        _DECODE_CACHE[key] = fn
    return _DECODE_CACHE[key]


def fused_generate(model, tokens, starts, temperature, nucleus_p, seed):
    """One pallas_call: full autoregressive top-p sampling for all rows.

    tokens: (R, L) int32 prompts padded with PAD_ID; starts: per-row prompt
    lengths (list/array of R ints). Rows are padded to a multiple of 8 and
    sharded over a parallel row-block grid axis."""
    R, L = tokens.shape
    R_pad = ((R + ROW_BLOCK - 1) // ROW_BLOCK) * ROW_BLOCK

    starts_np = np.asarray(starts, dtype=np.int32)
    tok_p = jnp.full((R_pad, L), PAD_ID, jnp.int32).at[:R, :].set(
        tokens.astype(jnp.int32))
    # padded rows get start = L so they never decode (stay PAD, discarded)
    starts_p = jnp.full((R_pad, 1), L, jnp.int32).at[:R, 0].set(
        jnp.asarray(starts_np))
    min_start = jnp.asarray([int(starts_np.min())], jnp.int32)

    gum = jax.random.gumbel(jax.random.PRNGKey(int(seed) & 0x7FFFFFFF),
                            (L, R_pad, VOCAB), jnp.float32)

    fn = _decode_fn(R_pad, L, temperature, nucleus_p)
    out = fn(min_start, starts_p, tok_p, gum, model.embed, model.w_out)
    return out[:R]


# -------------------------- toy model (weights only) ------------------------

class ToyLM:
    """Deterministic tiny 'model': mean-pooled embeddings + LM head (bf16).
    All numeric work (pool, matmuls, filtering, sampling) happens in-kernel."""

    def __init__(self, key):
        k1, k2 = jax.random.split(key)
        self.embed = (jax.random.normal(k1, (VOCAB, HIDDEN), jnp.float32)
                      * 0.1).astype(jnp.bfloat16)
        self.w_out = (jax.random.normal(k2, (HIDDEN, VOCAB), jnp.float32)
                      * 0.1).astype(jnp.bfloat16)


# ------------------- DPO dataset generator (host driver) -------------------

class DPODatasetGenerator:
    """JAX/Pallas analogue of the PyTorch DPODatasetGenerator.forward()."""

    def __init__(self, model, prompt_dataset):
        self.model = model
        self.prompt_dataset = prompt_dataset
        # in-memory stand-ins for the numpy memmaps
        self.preference_seq = np.full(
            (NUM_PREFERENCE_PAIRS, 2, PREFERENCE_MAX_SEQ_LEN), PAD_ID,
            dtype=np.int64)
        self.prompt_len = np.zeros((NUM_PREFERENCE_PAIRS,), dtype=np.int64)

    def _batched_candidates(self, prompt_tensors, prompt_lens, seed):
        """All candidates for all prompts of the batch in ONE decode call."""
        B = len(prompt_tensors)
        C = NUM_CANDIDATE_RESPONSES
        L = PREFERENCE_MAX_SEQ_LEN
        tokens = jnp.full((B * C, L), PAD_ID, jnp.int32)
        starts = []
        for b, (pt, plen) in enumerate(zip(prompt_tensors, prompt_lens)):
            tokens = tokens.at[b * C:(b + 1) * C, :plen].set(pt[None, :])
            starts += [plen] * C
        return fused_generate(self.model, tokens, starts,
                              GEN_TEMPERATURE, GEN_NUCLEUS_P, seed)

    def _batched_rewards(self, prompt_tensors, prompt_lens, candidates, seed):
        """Score all candidates of all prompts at once: one decode call with
        B * num_candidates * num_evals rows; reward mean reduced on device."""
        B = len(prompt_tensors)
        C = NUM_CANDIDATE_RESPONSES
        E = NUM_EVALS_TO_AVERAGE
        rlen = GENERATE_REWARD_MAX_SEQ_LEN - 2

        # "template(prompt, response)" -> concat of token ids (numeric
        # surrogate), truncated to the reward prompt budget, built on device.
        rp_rows = []
        for b, (pt, plen) in enumerate(zip(prompt_tensors, prompt_lens)):
            cand_b = candidates[b * C:(b + 1) * C]              # (C, L) device
            rp_full = jnp.concatenate(
                [jnp.broadcast_to(pt[None, :], (C, plen)), cand_b], axis=1)
            rp_rows.append(rp_full[:, :rlen])
        rp = jnp.concatenate(rp_rows, axis=0)                   # (B*C, rlen)

        reward_tokens = jnp.full((B * C * E, GENERATE_REWARD_MAX_SEQ_LEN),
                                 PAD_ID, jnp.int32)
        reward_tokens = reward_tokens.at[:, :rlen].set(
            jnp.repeat(rp, E, axis=0))

        out = fused_generate(self.model, reward_tokens, [rlen] * (B * C * E),
                             EVAL_TEMPERATURE, EVAL_NUCLEUS_P, seed)
        # surrogate parse_reward: first generated token id mod 11 -> [0, 10],
        # averaged over num_evals_to_average (tiny on-device reduction).
        first_gen = out[:, rlen]
        rewards = jnp.mean(
            (first_gen % 11).astype(jnp.float32).reshape(B, C, E), axis=-1)
        return rewards                                          # (B, C)

    def forward(self, seed0=1000):
        num_generated = 0
        prompt_idx = 0
        attempts = 0
        seed = int(seed0)
        B = BATCH_SIZE
        C = NUM_CANDIDATE_RESPONSES

        while num_generated < NUM_PREFERENCE_PAIRS and attempts < 25:
            attempts += 1
            prompts = [self.prompt_dataset[(prompt_idx + b)
                                           % len(self.prompt_dataset)]
                       for b in range(B)]
            prompt_idx += B
            prompt_tensors = [jnp.asarray(p, dtype=jnp.int32) for p in prompts]
            prompt_lens = [int(pt.shape[0]) for pt in prompt_tensors]

            seed += 1
            candidates = self._batched_candidates(prompt_tensors, prompt_lens,
                                                  seed)
            seed += 1
            rewards_dev = self._batched_rewards(prompt_tensors, prompt_lens,
                                                candidates, seed)

            # single host sync per batch of prompts
            cand_np, rewards_np = jax.device_get((candidates, rewards_dev))

            for b in range(B):
                if num_generated >= NUM_PREFERENCE_PAIRS:
                    break
                paired = [(float(rewards_np[b, c]), cand_np[b * C + c])
                          for c in range(C)]
                paired.sort(key=lambda pr: pr[0])   # same as original module
                if len(paired) < 2:
                    continue
                preferred_reward, preferred_response = paired[0]
                unpreferred_reward, unpreferred_response = paired[-1]
                if preferred_reward == unpreferred_reward:
                    continue
                self.prompt_len[num_generated] = prompt_lens[b]
                self.preference_seq[num_generated, 0] = np.asarray(
                    preferred_response, dtype=np.int64)
                self.preference_seq[num_generated, 1] = np.asarray(
                    unpreferred_response, dtype=np.int64)
                num_generated += 1

        return self.preference_seq, self.prompt_len


# --------------------------------- main -------------------------------------
if __name__ == "__main__":
    key = jax.random.PRNGKey(0)
    key, mk, pk = jax.random.split(key, 3)

    model = ToyLM(mk)

    # tiny deterministic "prompt dataset": token-id prompts of length 4..6
    prompt_dataset = [
        list(np.asarray(jax.random.randint(jax.random.fold_in(pk, i),
                                           (4 + (i % 3),), 0, VOCAB))
             .astype(np.int32))
        for i in range(BATCH_SIZE * 2)
    ]

    # ---- kernel smoke test: prompt preserved, generated tokens in range ----
    smoke_prompt = (jnp.arange(5, dtype=jnp.int32) * 7) % VOCAB
    smoke_tokens = jnp.full((NUM_CANDIDATE_RESPONSES, PREFERENCE_MAX_SEQ_LEN),
                            PAD_ID, jnp.int32)
    smoke_tokens = smoke_tokens.at[:, :5].set(smoke_prompt[None, :])
    smoke_starts = [5] * NUM_CANDIDATE_RESPONSES
    smoke_out = fused_generate(model, smoke_tokens, smoke_starts,
                               GEN_TEMPERATURE, GEN_NUCLEUS_P, seed=123)
    smoke_out = jax.block_until_ready(smoke_out)
    smoke_np = np.asarray(smoke_out)
    assert smoke_np.shape == (NUM_CANDIDATE_RESPONSES, PREFERENCE_MAX_SEQ_LEN)
    assert np.array_equal(smoke_np[:, :5], np.asarray(smoke_tokens[:, :5]))
    assert np.all((smoke_np[:, 5:] >= 0) & (smoke_np[:, 5:] < VOCAB))
    # determinism for a fixed seed (same external gumbel noise)
    smoke_out2 = jax.block_until_ready(
        fused_generate(model, smoke_tokens, smoke_starts,
                       GEN_TEMPERATURE, GEN_NUCLEUS_P, seed=123))
    assert np.array_equal(smoke_np, np.asarray(smoke_out2))

    # ---- full DPO preference-pair generation ----
    gen = DPODatasetGenerator(model, prompt_dataset)
    preference_seq, prompt_len = gen.forward(seed0=2024)

    # sanity: shapes match the memmap layout of the original module
    assert preference_seq.shape == (NUM_PREFERENCE_PAIRS, 2,
                                    PREFERENCE_MAX_SEQ_LEN)
    assert prompt_len.shape == (NUM_PREFERENCE_PAIRS,)

    print("KERNEL_OK")
</pallas_src>

<mosaic_0001>
module attributes {stable_mosaic.version = 11 : i64} {
  func.func @kernel(%arg0: i32, %arg1: memref<1xi32, #tpu.memory_space<smem>>, %arg2: memref<8x1xi32, #tpu.memory_space<vmem>>, %arg3: memref<8x16xi32, #tpu.memory_space<vmem>>, %arg4: memref<16x8x256xf32, #tpu.memory_space<vmem>>, %arg5: memref<256x128xbf16, #tpu.memory_space<vmem>>, %arg6: memref<128x256xbf16, #tpu.memory_space<vmem>>, %arg7: memref<8x16xi32, #tpu.memory_space<vmem>>) attributes {dimension_semantics = [#tpu.dimension_semantics<parallel>], iteration_bounds = array<i64: 1>, scalar_prefetch = 0 : i64, scratch_operands = 0 : i64, tpu.core_type = #tpu.core_type<tc>, window_params = [{transform_indices = @transform_0, window_bounds = array<i64: 1>}, {transform_indices = @transform_1, window_bounds = array<i64: 8, 1>}, {transform_indices = @transform_2, window_bounds = array<i64: 8, 16>}, {transform_indices = @transform_3, window_bounds = array<i64: 16, 8, 256>}, {pipeline_mode = #tpu.pipeline_mode<synchronous>, transform_indices = @transform_4, window_bounds = array<i64: 256, 128>}, {pipeline_mode = #tpu.pipeline_mode<synchronous>, transform_indices = @transform_5, window_bounds = array<i64: 128, 256>}, {transform_indices = @transform_6, window_bounds = array<i64: 8, 16>}]} {
    %c0 = arith.constant 0 : index
    %c0_0 = arith.constant 0 : index
    %0 = vector.load %arg3[%c0, %c0_0] : memref<8x16xi32, #tpu.memory_space<vmem>>, vector<8x16xi32>
    %c0_1 = arith.constant 0 : index
    %c0_2 = arith.constant 0 : index
    %1 = vector.load %arg2[%c0_1, %c0_2] : memref<8x1xi32, #tpu.memory_space<vmem>>, vector<8x1xi32>
    %2 = tpu.iota {dimensions = array<i32: 1>} : vector<8x256xi32>
    %3 = tpu.iota {dimensions = array<i32: 1>} : vector<8x16xi32>
    %cst = arith.constant 0.000000e+00 : f32
    %4 = vector.broadcast %cst : f32 to vector<8x256xf32>
    %5 = vector.extract_strided_slice %0 {offsets = [0, 0], sizes = [8, 1], strides = [1, 1]} : vector<8x16xi32> to vector<8x1xi32>
    %6 = vector.broadcast %5 : vector<8x1xi32> to vector<8x256xi32>
    %7 = arith.cmpi eq, %2, %6 : vector<8x256xi32>
    %c-1_i32 = arith.constant -1 : i32
    %8 = vector.broadcast %c-1_i32 : i32 to vector<8x1xi32>
    %9 = arith.cmpi ne, %5, %8 : vector<8x1xi32>
    %10 = vector.broadcast %9 : vector<8x1xi1> to vector<8x256xi1>
    %11 = arith.andi %7, %10 : vector<8x256xi1>
    %12 = arith.extui %11 : vector<8x256xi1> to vector<8x256xi32>
    %13 = arith.sitofp %12 : vector<8x256xi32> to vector<8x256xf32>
    %14 = arith.addf %4, %13 : vector<8x256xf32>
    %15 = vector.extract_strided_slice %0 {offsets = [0, 1], sizes = [8, 1], strides = [1, 1]} : vector<8x16xi32> to vector<8x1xi32>
    %16 = vector.broadcast %15 : vector<8x1xi32> to vector<8x256xi32>
    %17 = arith.cmpi eq, %2, %16 : vector<8x256xi32>
    %c-1_i32_3 = arith.constant -1 : i32
    %18 = vector.broadcast %c-1_i32_3 : i32 to vector<8x1xi32>
    %19 = arith.cmpi ne, %15, %18 : vector<8x1xi32>
    %20 = vector.broadcast %19 : vector<8x1xi1> to vector<8x256xi1>
    %21 = arith.andi %17, %20 : vector<8x256xi1>
    %22 = arith.extui %21 : vector<8x256xi1> to vector<8x256xi32>
    %23 = arith.sitofp %22 : vector<8x256xi32> to vector<8x256xf32>
    %24 = arith.addf %14, %23 : vector<8x256xf32>
    %25 = vector.extract_strided_slice %0 {offsets = [0, 2], sizes = [8, 1], strides = [1, 1]} : vector<8x16xi32> to vector<8x1xi32>
    %26 = vector.broadcast %25 : vector<8x1xi32> to vector<8x256xi32>
    %27 = arith.cmpi eq, %2, %26 : vector<8x256xi32>
    %c-1_i32_4 = arith.constant -1 : i32
    %28 = vector.broadcast %c-1_i32_4 : i32 to vector<8x1xi32>
    %29 = arith.cmpi ne, %25, %28 : vector<8x1xi32>
    %30 = vector.broadcast %29 : vector<8x1xi1> to vector<8x256xi1>
    %31 = arith.andi %27, %30 : vector<8x256xi1>
    %32 = arith.extui %31 : vector<8x256xi1> to vector<8x256xi32>
    %33 = arith.sitofp %32 : vector<8x256xi32> to vector<8x256xf32>
    %34 = arith.addf %24, %33 : vector<8x256xf32>
    %35 = vector.extract_strided_slice %0 {offsets = [0, 3], sizes = [8, 1], strides = [1, 1]} : vector<8x16xi32> to vector<8x1xi32>
    %36 = vector.broadcast %35 : vector<8x1xi32> to vector<8x256xi32>
    %37 = arith.cmpi eq, %2, %36 : vector<8x256xi32>
    %c-1_i32_5 = arith.constant -1 : i32
    %38 = vector.broadcast %c-1_i32_5 : i32 to vector<8x1xi32>
    %39 = arith.cmpi ne, %35, %38 : vector<8x1xi32>
    %40 = vector.broadcast %39 : vector<8x1xi1> to vector<8x256xi1>
    %41 = arith.andi %37, %40 : vector<8x256xi1>
    %42 = arith.extui %41 : vector<8x256xi1> to vector<8x256xi32>
    %43 = arith.sitofp %42 : vector<8x256xi32> to vector<8x256xf32>
    %44 = arith.addf %34, %43 : vector<8x256xf32>
    %45 = vector.extract_strided_slice %0 {offsets = [0, 4], sizes = [8, 1], strides = [1, 1]} : vector<8x16xi32> to vector<8x1xi32>
    %46 = vector.broadcast %45 : vector<8x1xi32> to vector<8x256xi32>
    %47 = arith.cmpi eq, %2, %46 : vector<8x256xi32>
    %c-1_i32_6 = arith.constant -1 : i32
    %48 = vector.broadcast %c-1_i32_6 : i32 to vector<8x1xi32>
    %49 = arith.cmpi ne, %45, %48 : vector<8x1xi32>
    %50 = vector.broadcast %49 : vector<8x1xi1> to vector<8x256xi1>
    %51 = arith.andi %47, %50 : vector<8x256xi1>
    %52 = arith.extui %51 : vector<8x256xi1> to vector<8x256xi32>
    %53 = arith.sitofp %52 : vector<8x256xi32> to vector<8x256xf32>
    %54 = arith.addf %44, %53 : vector<8x256xf32>
    %55 = vector.extract_strided_slice %0 {offsets = [0, 5], sizes = [8, 1], strides = [1, 1]} : vector<8x16xi32> to vector<8x1xi32>
    %56 = vector.broadcast %55 : vector<8x1xi32> to vector<8x256xi32>
    %57 = arith.cmpi eq, %2, %56 : vector<8x256xi32>
    %c-1_i32_7 = arith.constant -1 : i32
    %58 = vector.broadcast %c-1_i32_7 : i32 to vector<8x1xi32>
    %59 = arith.cmpi ne, %55, %58 : vector<8x1xi32>
    %60 = vector.broadcast %59 : vector<8x1xi1> to vector<8x256xi1>
    %61 = arith.andi %57, %60 : vector<8x256xi1>
    %62 = arith.extui %61 : vector<8x256xi1> to vector<8x256xi32>
    %63 = arith.sitofp %62 : vector<8x256xi32> to vector<8x256xf32>
    %64 = arith.addf %54, %63 : vector<8x256xf32>
    %65 = vector.extract_strided_slice %0 {offsets = [0, 6], sizes = [8, 1], strides = [1, 1]} : vector<8x16xi32> to vector<8x1xi32>
    %66 = vector.broadcast %65 : vector<8x1xi32> to vector<8x256xi32>
    %67 = arith.cmpi eq, %2, %66 : vector<8x256xi32>
    %c-1_i32_8 = arith.constant -1 : i32
    %68 = vector.broadcast %c-1_i32_8 : i32 to vector<8x1xi32>
    %69 = arith.cmpi ne, %65, %68 : vector<8x1xi32>
    %70 = vector.broadcast %69 : vector<8x1xi1> to vector<8x256xi1>
    %71 = arith.andi %67, %70 : vector<8x256xi1>
    %72 = arith.extui %71 : vector<8x256xi1> to vector<8x256xi32>
    %73 = arith.sitofp %72 : vector<8x256xi32> to vector<8x256xf32>
    %74 = arith.addf %64, %73 : vector<8x256xf32>
    %75 = vector.extract_strided_slice %0 {offsets = [0, 7], sizes = [8, 1], strides = [1, 1]} : vector<8x16xi32> to vector<8x1xi32>
    %76 = vector.broadcast %75 : vector<8x1xi32> to vector<8x256xi32>
    %77 = arith.cmpi eq, %2, %76 : vector<8x256xi32>
    %c-1_i32_9 = arith.constant -1 : i32
    %78 = vector.broadcast %c-1_i32_9 : i32 to vector<8x1xi32>
    %79 = arith.cmpi ne, %75, %78 : vector<8x1xi32>
    %80 = vector.broadcast %79 : vector<8x1xi1> to vector<8x256xi1>
    %81 = arith.andi %77, %80 : vector<8x256xi1>
    %82 = arith.extui %81 : vector<8x256xi1> to vector<8x256xi32>
    %83 = arith.sitofp %82 : vector<8x256xi32> to vector<8x256xf32>
    %84 = arith.addf %74, %83 : vector<8x256xf32>
    %85 = vector.extract_strided_slice %0 {offsets = [0, 8], sizes = [8, 1], strides = [1, 1]} : vector<8x16xi32> to vector<8x1xi32>
    %86 = vector.broadcast %85 : vector<8x1xi32> to vector<8x256xi32>
    %87 = arith.cmpi eq, %2, %86 : vector<8x256xi32>
    %c-1_i32_10 = arith.constant -1 : i32
    %88 = vector.broadcast %c-1_i32_10 : i32 to vector<8x1xi32>
    %89 = arith.cmpi ne, %85, %88 : vector<8x1xi32>
    %90 = vector.broadcast %89 : vector<8x1xi1> to vector<8x256xi1>
    %91 = arith.andi %87, %90 : vector<8x256xi1>
    %92 = arith.extui %91 : vector<8x256xi1> to vector<8x256xi32>
    %93 = arith.sitofp %92 : vector<8x256xi32> to vector<8x256xf32>
    %94 = arith.addf %84, %93 : vector<8x256xf32>
    %95 = vector.extract_strided_slice %0 {offsets = [0, 9], sizes = [8, 1], strides = [1, 1]} : vector<8x16xi32> to vector<8x1xi32>
    %96 = vector.broadcast %95 : vector<8x1xi32> to vector<8x256xi32>
    %97 = arith.cmpi eq, %2, %96 : vector<8x256xi32>
    %c-1_i32_11 = arith.constant -1 : i32
    %98 = vector.broadcast %c-1_i32_11 : i32 to vector<8x1xi32>
    %99 = arith.cmpi ne, %95, %98 : vector<8x1xi32>
    %100 = vector.broadcast %99 : vector<8x1xi1> to vector<8x256xi1>
    %101 = arith.andi %97, %100 : vector<8x256xi1>
    %102 = arith.extui %101 : vector<8x256xi1> to vector<8x256xi32>
    %103 = arith.sitofp %102 : vector<8x256xi32> to vector<8x256xf32>
    %104 = arith.addf %94, %103 : vector<8x256xf32>
    %105 = vector.extract_strided_slice %0 {offsets = [0, 10], sizes = [8, 1], strides = [1, 1]} : vector<8x16xi32> to vector<8x1xi32>
    %106 = vector.broadcast %105 : vector<8x1xi32> to vector<8x256xi32>
    %107 = arith.cmpi eq, %2, %106 : vector<8x256xi32>
    %c-1_i32_12 = arith.constant -1 : i32
    %108 = vector.broadcast %c-1_i32_12 : i32 to vector<8x1xi32>
    %109 = arith.cmpi ne, %105, %108 : vector<8x1xi32>
    %110 = vector.broadcast %109 : vector<8x1xi1> to vector<8x256xi1>
    %111 = arith.andi %107, %110 : vector<8x256xi1>
    %112 = arith.extui %111 : vector<8x256xi1> to vector<8x256xi32>
    %113 = arith.sitofp %112 : vector<8x256xi32> to vector<8x256xf32>
    %114 = arith.addf %104, %113 : vector<8x256xf32>
    %115 = vector.extract_strided_slice %0 {offsets = [0, 11], sizes = [8, 1], strides = [1, 1]} : vector<8x16xi32> to vector<8x1xi32>
    %116 = vector.broadcast %115 : vector<8x1xi32> to vector<8x256xi32>
    %117 = arith.cmpi eq, %2, %116 : vector<8x256xi32>
    %c-1_i32_13 = arith.constant -1 : i32
    %118 = vector.broadcast %c-1_i32_13 : i32 to vector<8x1xi32>
    %119 = arith.cmpi ne, %115, %118 : vector<8x1xi32>
    %120 = vector.broadcast %119 : vector<8x1xi1> to vector<8x256xi1>
    %121 = arith.andi %117, %120 : vector<8x256xi1>
    %122 = arith.extui %121 : vector<8x256xi1> to vector<8x256xi32>
    %123 = arith.sitofp %122 : vector<8x256xi32> to vector<8x256xf32>
    %124 = arith.addf %114, %123 : vector<8x256xf32>
    %125 = vector.extract_strided_slice %0 {offsets = [0, 12], sizes = [8, 1], strides = [1, 1]} : vector<8x16xi32> to vector<8x1xi32>
    %126 = vector.broadcast %125 : vector<8x1xi32> to vector<8x256xi32>
    %127 = arith.cmpi eq, %2, %126 : vector<8x256xi32>
    %c-1_i32_14 = arith.constant -1 : i32
    %128 = vector.broadcast %c-1_i32_14 : i32 to vector<8x1xi32>
    %129 = arith.cmpi ne, %125, %128 : vector<8x1xi32>
    %130 = vector.broadcast %129 : vector<8x1xi1> to vector<8x256xi1>
    %131 = arith.andi %127, %130 : vector<8x256xi1>
    %132 = arith.extui %131 : vector<8x256xi1> to vector<8x256xi32>
    %133 = arith.sitofp %132 : vector<8x256xi32> to vector<8x256xf32>
    %134 = arith.addf %124, %133 : vector<8x256xf32>
    %135 = vector.extract_strided_slice %0 {offsets = [0, 13], sizes = [8, 1], strides = [1, 1]} : vector<8x16xi32> to vector<8x1xi32>
    %136 = vector.broadcast %135 : vector<8x1xi32> to vector<8x256xi32>
    %137 = arith.cmpi eq, %2, %136 : vector<8x256xi32>
    %c-1_i32_15 = arith.constant -1 : i32
    %138 = vector.broadcast %c-1_i32_15 : i32 to vector<8x1xi32>
    %139 = arith.cmpi ne, %135, %138 : vector<8x1xi32>
    %140 = vector.broadcast %139 : vector<8x1xi1> to vector<8x256xi1>
    %141 = arith.andi %137, %140 : vector<8x256xi1>
    %142 = arith.extui %141 : vector<8x256xi1> to vector<8x256xi32>
    %143 = arith.sitofp %142 : vector<8x256xi32> to vector<8x256xf32>
    %144 = arith.addf %134, %143 : vector<8x256xf32>
    %145 = vector.extract_strided_slice %0 {offsets = [0, 14], sizes = [8, 1], strides = [1, 1]} : vector<8x16xi32> to vector<8x1xi32>
    %146 = vector.broadcast %145 : vector<8x1xi32> to vector<8x256xi32>
    %147 = arith.cmpi eq, %2, %146 : vector<8x256xi32>
    %c-1_i32_16 = arith.constant -1 : i32
    %148 = vector.broadcast %c-1_i32_16 : i32 to vector<8x1xi32>
    %149 = arith.cmpi ne, %145, %148 : vector<8x1xi32>
    %150 = vector.broadcast %149 : vector<8x1xi1> to vector<8x256xi1>
    %151 = arith.andi %147, %150 : vector<8x256xi1>
    %152 = arith.extui %151 : vector<8x256xi1> to vector<8x256xi32>
    %153 = arith.sitofp %152 : vector<8x256xi32> to vector<8x256xf32>
    %154 = arith.addf %144, %153 : vector<8x256xf32>
    %155 = vector.extract_strided_slice %0 {offsets = [0, 15], sizes = [8, 1], strides = [1, 1]} : vector<8x16xi32> to vector<8x1xi32>
    %156 = vector.broadcast %155 : vector<8x1xi32> to vector<8x256xi32>
    %157 = arith.cmpi eq, %2, %156 : vector<8x256xi32>
    %c-1_i32_17 = arith.constant -1 : i32
    %158 = vector.broadcast %c-1_i32_17 : i32 to vector<8x1xi32>
    %159 = arith.cmpi ne, %155, %158 : vector<8x1xi32>
    %160 = vector.broadcast %159 : vector<8x1xi1> to vector<8x256xi1>
    %161 = arith.andi %157, %160 : vector<8x256xi1>
    %162 = arith.extui %161 : vector<8x256xi1> to vector<8x256xi32>
    %163 = arith.sitofp %162 : vector<8x256xi32> to vector<8x256xf32>
    %164 = arith.addf %154, %163 : vector<8x256xf32>
    %c0_18 = arith.constant 0 : index
    %165 = memref.load %arg1[%c0_18] : memref<1xi32, #tpu.memory_space<smem>>
    %c16_i32 = arith.constant 16 : i32
    %166 = arith.subi %c16_i32, %165 : i32
    %167 = arith.addi %165, %166 : i32
    %c1_i32 = arith.constant 1 : i32
    %168:2 = scf.for %arg8 = %165 to %167 step %c1_i32 iter_args(%arg9 = %164, %arg10 = %0) -> (vector<8x256xf32>, vector<8x16xi32>)  : i32 {
      %cst_21 = arith.constant dense<0.000000e+00> : vector<8xf32>
      %170 = vector.multi_reduction <add>, %arg9, %cst_21 [1] : vector<8x256xf32> to vector<8xf32>
      %171 = vector.shape_cast %170 : vector<8xf32> to vector<8x1xf32>
      %cst_22 = arith.constant 1.000000e+00 : f32
      %172 = vector.broadcast %cst_22 : f32 to vector<8x1xf32>
      %173 = arith.maximumf %171, %172 : vector<8x1xf32>
      %174 = arith.truncf %arg9 : vector<8x256xf32> to vector<8x256xbf16>
      %c0_23 = arith.constant 0 : index
      %c0_24 = arith.constant 0 : index
      %175 = vector.load %arg5[%c0_23, %c0_24] : memref<256x128xbf16, #tpu.memory_space<vmem>>, vector<256x128xbf16>
      %cst_25 = arith.constant dense<0.000000e+00> : vector<8x128xf32>
      %176 = tpu.matmul %174, %175, %cst_25 {dimension_numbers = #tpu.dot_dimension_numbers<[1], [0], [0], [1], [0, 0, 1, 1], [], []>} : vector<8x256xbf16>, vector<256x128xbf16>, vector<8x128xf32> -> vector<8x128xf32>
      %177 = vector.broadcast %173 : vector<8x1xf32> to vector<8x128xf32>
      %178 = arith.divf %176, %177 : vector<8x128xf32>
      %179 = arith.truncf %178 : vector<8x128xf32> to vector<8x128xbf16>
      %c0_26 = arith.constant 0 : index
      %c0_27 = arith.constant 0 : index
      %180 = vector.load %arg6[%c0_26, %c0_27] : memref<128x256xbf16, #tpu.memory_space<vmem>>, vector<128x256xbf16>
      %cst_28 = arith.constant dense<0.000000e+00> : vector<8x256xf32>
      %181 = tpu.matmul %179, %180, %cst_28 {dimension_numbers = #tpu.dot_dimension_numbers<[1], [0], [0], [1], [0, 0, 1, 1], [], []>} : vector<8x128xbf16>, vector<128x256xbf16>, vector<8x256xf32> -> vector<8x256xf32>
      %cst_29 = arith.constant dense<0xFF800000> : vector<8xf32>
      %182 = vector.multi_reduction <maximumf>, %181, %cst_29 [1] : vector<8x256xf32> to vector<8xf32>
      %183 = vector.shape_cast %182 : vector<8xf32> to vector<8x1xf32>
      %184 = vector.broadcast %183 : vector<8x1xf32> to vector<8x256xf32>
      %185 = arith.subf %181, %184 : vector<8x256xf32>
      %186 = math.exp %185 : vector<8x256xf32>
      %cst_30 = arith.constant dense<0.000000e+00> : vector<8xf32>
      %187 = vector.multi_reduction <add>, %186, %cst_30 [1] : vector<8x256xf32> to vector<8xf32>
      %188 = vector.shape_cast %187 : vector<8xf32> to vector<8x1xf32>
      %cst_31 = arith.constant 0.899999976 : f32
      %189 = vector.broadcast %cst_31 : f32 to vector<8x1xf32>
      %190 = arith.mulf %189, %188 : vector<8x1xf32>
      %cst_32 = arith.constant dense<0x7F800000> : vector<8xf32>
      %191 = vector.multi_reduction <minimumf>, %181, %cst_32 [1] : vector<8x256xf32> to vector<8xf32>
      %192 = vector.shape_cast %191 : vector<8xf32> to vector<8x1xf32>
      %cst_33 = arith.constant 1.000000e+00 : f32
      %193 = vector.broadcast %cst_33 : f32 to vector<8x1xf32>
      %194 = arith.subf %192, %193 : vector<8x1xf32>
      %195 = arith.addf %194, %183 : vector<8x1xf32>
      %cst_34 = arith.constant 5.000000e-01 : f32
      %196 = vector.broadcast %cst_34 : f32 to vector<8x1xf32>
      %197 = arith.mulf %196, %195 : vector<8x1xf32>
      %198 = vector.broadcast %197 : vector<8x1xf32> to vector<8x256xf32>
      %199 = arith.cmpf ogt, %181, %198 : vector<8x256xf32>
      %cst_35 = arith.constant 0.000000e+00 : f32
      %200 = vector.broadcast %cst_35 : f32 to vector<8x256xf32>
      %201 = arith.select %199, %186, %200 : vector<8x256xi1>, vector<8x256xf32>
      %cst_36 = arith.constant dense<0.000000e+00> : vector<8xf32>
      %202 = vector.multi_reduction <add>, %201, %cst_36 [1] : vector<8x256xf32> to vector<8xf32>
      %203 = vector.shape_cast %202 : vector<8xf32> to vector<8x1xf32>
      %204 = arith.cmpf ogt, %203, %190 : vector<8x1xf32>
      %205 = arith.select %204, %197, %194 : vector<8x1xi1>, vector<8x1xf32>
      %206 = arith.select %204, %183, %197 : vector<8x1xi1>, vector<8x1xf32>
      %207 = arith.addf %205, %206 : vector<8x1xf32>
      %cst_37 = arith.constant 5.000000e-01 : f32
      %208 = vector.broadcast %cst_37 : f32 to vector<8x1xf32>
      %209 = arith.mulf %208, %207 : vector<8x1xf32>
      %210 = vector.broadcast %209 : vector<8x1xf32> to vector<8x256xf32>
      %211 = arith.cmpf ogt, %181, %210 : vector<8x256xf32>
      %cst_38 = arith.constant 0.000000e+00 : f32
      %212 = vector.broadcast %cst_38 : f32 to vector<8x256xf32>
      %213 = arith.select %211, %186, %212 : vector<8x256xi1>, vector<8x256xf32>
      %cst_39 = arith.constant dense<0.000000e+00> : vector<8xf32>
      %214 = vector.multi_reduction <add>, %213, %cst_39 [1] : vector<8x256xf32> to vector<8xf32>
      %215 = vector.shape_cast %214 : vector<8xf32> to vector<8x1xf32>
      %216 = arith.cmpf ogt, %215, %190 : vector<8x1xf32>
      %217 = arith.select %216, %209, %205 : vector<8x1xi1>, vector<8x1xf32>
      %218 = arith.select %216, %206, %209 : vector<8x1xi1>, vector<8x1xf32>
      %219 = arith.addf %217, %218 : vector<8x1xf32>
      %cst_40 = arith.constant 5.000000e-01 : f32
      %220 = vector.broadcast %cst_40 : f32 to vector<8x1xf32>
      %221 = arith.mulf %220, %219 : vector<8x1xf32>
      %222 = vector.broadcast %221 : vector<8x1xf32> to vector<8x256xf32>
      %223 = arith.cmpf ogt, %181, %222 : vector<8x256xf32>
      %cst_41 = arith.constant 0.000000e+00 : f32
      %224 = vector.broadcast %cst_41 : f32 to vector<8x256xf32>
      %225 = arith.select %223, %186, %224 : vector<8x256xi1>, vector<8x256xf32>
      %cst_42 = arith.constant dense<0.000000e+00> : vector<8xf32>
      %226 = vector.multi_reduction <add>, %225, %cst_42 [1] : vector<8x256xf32> to vector<8xf32>
      %227 = vector.shape_cast %226 : vector<8xf32> to vector<8x1xf32>
      %228 = arith.cmpf ogt, %227, %190 : vector<8x1xf32>
      %229 = arith.select %228, %221, %217 : vector<8x1xi1>, vector<8x1xf32>
      %230 = arith.select %228, %218, %221 : vector<8x1xi1>, vector<8x1xf32>
      %231 = arith.addf %229, %230 : vector<8x1xf32>
      %cst_43 = arith.constant 5.000000e-01 : f32
      %232 = vector.broadcast %cst_43 : f32 to vector<8x1xf32>
      %233 = arith.mulf %232, %231 : vector<8x1xf32>
      %234 = vector.broadcast %233 : vector<8x1xf32> to vector<8x256xf32>
      %235 = arith.cmpf ogt, %181, %234 : vector<8x256xf32>
      %cst_44 = arith.constant 0.000000e+00 : f32
      %236 = vector.broadcast %cst_44 : f32 to vector<8x256xf32>
      %237 = arith.select %235, %186, %236 : vector<8x256xi1>, vector<8x256xf32>
      %cst_45 = arith.constant dense<0.000000e+00> : vector<8xf32>
      %238 = vector.multi_reduction <add>, %237, %cst_45 [1] : vector<8x256xf32> to vector<8xf32>
      %239 = vector.shape_cast %238 : vector<8xf32> to vector<8x1xf32>
      %240 = arith.cmpf ogt, %239, %190 : vector<8x1xf32>
      %241 = arith.select %240, %233, %229 : vector<8x1xi1>, vector<8x1xf32>
      %242 = arith.select %240, %230, %233 : vector<8x1xi1>, vector<8x1xf32>
      %243 = arith.addf %241, %242 : vector<8x1xf32>
      %cst_46 = arith.constant 5.000000e-01 : f32
      %244 = vector.broadcast %cst_46 : f32 to vector<8x1xf32>
      %245 = arith.mulf %244, %243 : vector<8x1xf32>
      %246 = vector.broadcast %245 : vector<8x1xf32> to vector<8x256xf32>
      %247 = arith.cmpf ogt, %181, %246 : vector<8x256xf32>
      %cst_47 = arith.constant 0.000000e+00 : f32
      %248 = vector.broadcast %cst_47 : f32 to vector<8x256xf32>
      %249 = arith.select %247, %186, %248 : vector<8x256xi1>, vector<8x256xf32>
      %cst_48 = arith.constant dense<0.000000e+00> : vector<8xf32>
      %250 = vector.multi_reduction <add>, %249, %cst_48 [1] : vector<8x256xf32> to vector<8xf32>
      %251 = vector.shape_cast %250 : vector<8xf32> to vector<8x1xf32>
      %252 = arith.cmpf ogt, %251, %190 : vector<8x1xf32>
      %253 = arith.select %252, %245, %241 : vector<8x1xi1>, vector<8x1xf32>
      %254 = arith.select %252, %242, %245 : vector<8x1xi1>, vector<8x1xf32>
      %255 = arith.addf %253, %254 : vector<8x1xf32>
      %cst_49 = arith.constant 5.000000e-01 : f32
      %256 = vector.broadcast %cst_49 : f32 to vector<8x1xf32>
      %257 = arith.mulf %256, %255 : vector<8x1xf32>
      %258 = vector.broadcast %257 : vector<8x1xf32> to vector<8x256xf32>
      %259 = arith.cmpf ogt, %181, %258 : vector<8x256xf32>
      %cst_50 = arith.constant 0.000000e+00 : f32
      %260 = vector.broadcast %cst_50 : f32 to vector<8x256xf32>
      %261 = arith.select %259, %186, %260 : vector<8x256xi1>, vector<8x256xf32>
      %cst_51 = arith.constant dense<0.000000e+00> : vector<8xf32>
      %262 = vector.multi_reduction <add>, %261, %cst_51 [1] : vector<8x256xf32> to vector<8xf32>
      %263 = vector.shape_cast %262 : vector<8xf32> to vector<8x1xf32>
      %264 = arith.cmpf ogt, %263, %190 : vector<8x1xf32>
      %265 = arith.select %264, %257, %253 : vector<8x1xi1>, vector<8x1xf32>
      %266 = arith.select %264, %254, %257 : vector<8x1xi1>, vector<8x1xf32>
      %267 = arith.addf %265, %266 : vector<8x1xf32>
      %cst_52 = arith.constant 5.000000e-01 : f32
      %268 = vector.broadcast %cst_52 : f32 to vector<8x1xf32>
      %269 = arith.mulf %268, %267 : vector<8x1xf32>
      %270 = vector.broadcast %269 : vector<8x1xf32> to vector<8x256xf32>
      %271 = arith.cmpf ogt, %181, %270 : vector<8x256xf32>
      %cst_53 = arith.constant 0.000000e+00 : f32
      %272 = vector.broadcast %cst_53 : f32 to vector<8x256xf32>
      %273 = arith.select %271, %186, %272 : vector<8x256xi1>, vector<8x256xf32>
      %cst_54 = arith.constant dense<0.000000e+00> : vector<8xf32>
      %274 = vector.multi_reduction <add>, %273, %cst_54 [1] : vector<8x256xf32> to vector<8xf32>
      %275 = vector.shape_cast %274 : vector<8xf32> to vector<8x1xf32>
      %276 = arith.cmpf ogt, %275, %190 : vector<8x1xf32>
      %277 = arith.select %276, %269, %265 : vector<8x1xi1>, vector<8x1xf32>
      %278 = arith.select %276, %266, %269 : vector<8x1xi1>, vector<8x1xf32>
      %279 = arith.addf %277, %278 : vector<8x1xf32>
      %cst_55 = arith.constant 5.000000e-01 : f32
      %280 = vector.broadcast %cst_55 : f32 to vector<8x1xf32>
      %281 = arith.mulf %280, %279 : vector<8x1xf32>
      %282 = vector.broadcast %281 : vector<8x1xf32> to vector<8x256xf32>
      %283 = arith.cmpf ogt, %181, %282 : vector<8x256xf32>
      %cst_56 = arith.constant 0.000000e+00 : f32
      %284 = vector.broadcast %cst_56 : f32 to vector<8x256xf32>
      %285 = arith.select %283, %186, %284 : vector<8x256xi1>, vector<8x256xf32>
      %cst_57 = arith.constant dense<0.000000e+00> : vector<8xf32>
      %286 = vector.multi_reduction <add>, %285, %cst_57 [1] : vector<8x256xf32> to vector<8xf32>
      %287 = vector.shape_cast %286 : vector<8xf32> to vector<8x1xf32>
      %288 = arith.cmpf ogt, %287, %190 : vector<8x1xf32>
      %289 = arith.select %288, %281, %277 : vector<8x1xi1>, vector<8x1xf32>
      %290 = arith.select %288, %278, %281 : vector<8x1xi1>, vector<8x1xf32>
      %291 = arith.addf %289, %290 : vector<8x1xf32>
      %cst_58 = arith.constant 5.000000e-01 : f32
      %292 = vector.broadcast %cst_58 : f32 to vector<8x1xf32>
      %293 = arith.mulf %292, %291 : vector<8x1xf32>
      %294 = vector.broadcast %293 : vector<8x1xf32> to vector<8x256xf32>
      %295 = arith.cmpf ogt, %181, %294 : vector<8x256xf32>
      %cst_59 = arith.constant 0.000000e+00 : f32
      %296 = vector.broadcast %cst_59 : f32 to vector<8x256xf32>
      %297 = arith.select %295, %186, %296 : vector<8x256xi1>, vector<8x256xf32>
      %cst_60 = arith.constant dense<0.000000e+00> : vector<8xf32>
      %298 = vector.multi_reduction <add>, %297, %cst_60 [1] : vector<8x256xf32> to vector<8xf32>
      %299 = vector.shape_cast %298 : vector<8xf32> to vector<8x1xf32>
      %300 = arith.cmpf ogt, %299, %190 : vector<8x1xf32>
      %301 = arith.select %300, %293, %289 : vector<8x1xi1>, vector<8x1xf32>
      %302 = arith.select %300, %290, %293 : vector<8x1xi1>, vector<8x1xf32>
      %303 = arith.addf %301, %302 : vector<8x1xf32>
      %cst_61 = arith.constant 5.000000e-01 : f32
      %304 = vector.broadcast %cst_61 : f32 to vector<8x1xf32>
      %305 = arith.mulf %304, %303 : vector<8x1xf32>
      %306 = vector.broadcast %305 : vector<8x1xf32> to vector<8x256xf32>
      %307 = arith.cmpf ogt, %181, %306 : vector<8x256xf32>
      %cst_62 = arith.constant 0.000000e+00 : f32
      %308 = vector.broadcast %cst_62 : f32 to vector<8x256xf32>
      %309 = arith.select %307, %186, %308 : vector<8x256xi1>, vector<8x256xf32>
      %cst_63 = arith.constant dense<0.000000e+00> : vector<8xf32>
      %310 = vector.multi_reduction <add>, %309, %cst_63 [1] : vector<8x256xf32> to vector<8xf32>
      %311 = vector.shape_cast %310 : vector<8xf32> to vector<8x1xf32>
      %312 = arith.cmpf ogt, %311, %190 : vector<8x1xf32>
      %313 = arith.select %312, %305, %301 : vector<8x1xi1>, vector<8x1xf32>
      %314 = arith.select %312, %302, %305 : vector<8x1xi1>, vector<8x1xf32>
      %315 = arith.addf %313, %314 : vector<8x1xf32>
      %cst_64 = arith.constant 5.000000e-01 : f32
      %316 = vector.broadcast %cst_64 : f32 to vector<8x1xf32>
      %317 = arith.mulf %316, %315 : vector<8x1xf32>
      %318 = vector.broadcast %317 : vector<8x1xf32> to vector<8x256xf32>
      %319 = arith.cmpf ogt, %181, %318 : vector<8x256xf32>
      %cst_65 = arith.constant 0.000000e+00 : f32
      %320 = vector.broadcast %cst_65 : f32 to vector<8x256xf32>
      %321 = arith.select %319, %186, %320 : vector<8x256xi1>, vector<8x256xf32>
      %cst_66 = arith.constant dense<0.000000e+00> : vector<8xf32>
      %322 = vector.multi_reduction <add>, %321, %cst_66 [1] : vector<8x256xf32> to vector<8xf32>
      %323 = vector.shape_cast %322 : vector<8xf32> to vector<8x1xf32>
      %324 = arith.cmpf ogt, %323, %190 : vector<8x1xf32>
      %325 = arith.select %324, %317, %313 : vector<8x1xi1>, vector<8x1xf32>
      %326 = arith.select %324, %314, %317 : vector<8x1xi1>, vector<8x1xf32>
      %327 = arith.addf %325, %326 : vector<8x1xf32>
      %cst_67 = arith.constant 5.000000e-01 : f32
      %328 = vector.broadcast %cst_67 : f32 to vector<8x1xf32>
      %329 = arith.mulf %328, %327 : vector<8x1xf32>
      %330 = vector.broadcast %329 : vector<8x1xf32> to vector<8x256xf32>
      %331 = arith.cmpf ogt, %181, %330 : vector<8x256xf32>
      %cst_68 = arith.constant 0.000000e+00 : f32
      %332 = vector.broadcast %cst_68 : f32 to vector<8x256xf32>
      %333 = arith.select %331, %186, %332 : vector<8x256xi1>, vector<8x256xf32>
      %cst_69 = arith.constant dense<0.000000e+00> : vector<8xf32>
      %334 = vector.multi_reduction <add>, %333, %cst_69 [1] : vector<8x256xf32> to vector<8xf32>
      %335 = vector.shape_cast %334 : vector<8xf32> to vector<8x1xf32>
      %336 = arith.cmpf ogt, %335, %190 : vector<8x1xf32>
      %337 = arith.select %336, %329, %325 : vector<8x1xi1>, vector<8x1xf32>
      %338 = arith.select %336, %326, %329 : vector<8x1xi1>, vector<8x1xf32>
      %339 = arith.addf %337, %338 : vector<8x1xf32>
      %cst_70 = arith.constant 5.000000e-01 : f32
      %340 = vector.broadcast %cst_70 : f32 to vector<8x1xf32>
      %341 = arith.mulf %340, %339 : vector<8x1xf32>
      %342 = vector.broadcast %341 : vector<8x1xf32> to vector<8x256xf32>
      %343 = arith.cmpf ogt, %181, %342 : vector<8x256xf32>
      %cst_71 = arith.constant 0.000000e+00 : f32
      %344 = vector.broadcast %cst_71 : f32 to vector<8x256xf32>
      %345 = arith.select %343, %186, %344 : vector<8x256xi1>, vector<8x256xf32>
      %cst_72 = arith.constant dense<0.000000e+00> : vector<8xf32>
      %346 = vector.multi_reduction <add>, %345, %cst_72 [1] : vector<8x256xf32> to vector<8xf32>
      %347 = vector.shape_cast %346 : vector<8xf32> to vector<8x1xf32>
      %348 = arith.cmpf ogt, %347, %190 : vector<8x1xf32>
      %349 = arith.select %348, %341, %337 : vector<8x1xi1>, vector<8x1xf32>
      %350 = arith.select %348, %338, %341 : vector<8x1xi1>, vector<8x1xf32>
      %351 = arith.addf %349, %350 : vector<8x1xf32>
      %cst_73 = arith.constant 5.000000e-01 : f32
      %352 = vector.broadcast %cst_73 : f32 to vector<8x1xf32>
      %353 = arith.mulf %352, %351 : vector<8x1xf32>
      %354 = vector.broadcast %353 : vector<8x1xf32> to vector<8x256xf32>
      %355 = arith.cmpf ogt, %181, %354 : vector<8x256xf32>
      %cst_74 = arith.constant 0.000000e+00 : f32
      %356 = vector.broadcast %cst_74 : f32 to vector<8x256xf32>
      %357 = arith.select %355, %186, %356 : vector<8x256xi1>, vector<8x256xf32>
      %cst_75 = arith.constant dense<0.000000e+00> : vector<8xf32>
      %358 = vector.multi_reduction <add>, %357, %cst_75 [1] : vector<8x256xf32> to vector<8xf32>
      %359 = vector.shape_cast %358 : vector<8xf32> to vector<8x1xf32>
      %360 = arith.cmpf ogt, %359, %190 : vector<8x1xf32>
      %361 = arith.select %360, %353, %349 : vector<8x1xi1>, vector<8x1xf32>
      %362 = arith.select %360, %350, %353 : vector<8x1xi1>, vector<8x1xf32>
      %363 = arith.addf %361, %362 : vector<8x1xf32>
      %cst_76 = arith.constant 5.000000e-01 : f32
      %364 = vector.broadcast %cst_76 : f32 to vector<8x1xf32>
      %365 = arith.mulf %364, %363 : vector<8x1xf32>
      %366 = vector.broadcast %365 : vector<8x1xf32> to vector<8x256xf32>
      %367 = arith.cmpf ogt, %181, %366 : vector<8x256xf32>
      %cst_77 = arith.constant 0.000000e+00 : f32
      %368 = vector.broadcast %cst_77 : f32 to vector<8x256xf32>
      %369 = arith.select %367, %186, %368 : vector<8x256xi1>, vector<8x256xf32>
      %cst_78 = arith.constant dense<0.000000e+00> : vector<8xf32>
      %370 = vector.multi_reduction <add>, %369, %cst_78 [1] : vector<8x256xf32> to vector<8xf32>
      %371 = vector.shape_cast %370 : vector<8xf32> to vector<8x1xf32>
      %372 = arith.cmpf ogt, %371, %190 : vector<8x1xf32>
      %373 = arith.select %372, %365, %361 : vector<8x1xi1>, vector<8x1xf32>
      %374 = arith.select %372, %362, %365 : vector<8x1xi1>, vector<8x1xf32>
      %375 = arith.addf %373, %374 : vector<8x1xf32>
      %cst_79 = arith.constant 5.000000e-01 : f32
      %376 = vector.broadcast %cst_79 : f32 to vector<8x1xf32>
      %377 = arith.mulf %376, %375 : vector<8x1xf32>
      %378 = vector.broadcast %377 : vector<8x1xf32> to vector<8x256xf32>
      %379 = arith.cmpf ogt, %181, %378 : vector<8x256xf32>
      %cst_80 = arith.constant 0.000000e+00 : f32
      %380 = vector.broadcast %cst_80 : f32 to vector<8x256xf32>
      %381 = arith.select %379, %186, %380 : vector<8x256xi1>, vector<8x256xf32>
      %cst_81 = arith.constant dense<0.000000e+00> : vector<8xf32>
      %382 = vector.multi_reduction <add>, %381, %cst_81 [1] : vector<8x256xf32> to vector<8xf32>
      %383 = vector.shape_cast %382 : vector<8xf32> to vector<8x1xf32>
      %384 = arith.cmpf ogt, %383, %190 : vector<8x1xf32>
      %385 = arith.select %384, %377, %373 : vector<8x1xi1>, vector<8x1xf32>
      %386 = arith.select %384, %374, %377 : vector<8x1xi1>, vector<8x1xf32>
      %387 = arith.addf %385, %386 : vector<8x1xf32>
      %cst_82 = arith.constant 5.000000e-01 : f32
      %388 = vector.broadcast %cst_82 : f32 to vector<8x1xf32>
      %389 = arith.mulf %388, %387 : vector<8x1xf32>
      %390 = vector.broadcast %389 : vector<8x1xf32> to vector<8x256xf32>
      %391 = arith.cmpf ogt, %181, %390 : vector<8x256xf32>
      %cst_83 = arith.constant 0.000000e+00 : f32
      %392 = vector.broadcast %cst_83 : f32 to vector<8x256xf32>
      %393 = arith.select %391, %186, %392 : vector<8x256xi1>, vector<8x256xf32>
      %cst_84 = arith.constant dense<0.000000e+00> : vector<8xf32>
      %394 = vector.multi_reduction <add>, %393, %cst_84 [1] : vector<8x256xf32> to vector<8xf32>
      %395 = vector.shape_cast %394 : vector<8xf32> to vector<8x1xf32>
      %396 = arith.cmpf ogt, %395, %190 : vector<8x1xf32>
      %397 = arith.select %396, %389, %385 : vector<8x1xi1>, vector<8x1xf32>
      %398 = arith.select %396, %386, %389 : vector<8x1xi1>, vector<8x1xf32>
      %399 = arith.addf %397, %398 : vector<8x1xf32>
      %cst_85 = arith.constant 5.000000e-01 : f32
      %400 = vector.broadcast %cst_85 : f32 to vector<8x1xf32>
      %401 = arith.mulf %400, %399 : vector<8x1xf32>
      %402 = vector.broadcast %401 : vector<8x1xf32> to vector<8x256xf32>
      %403 = arith.cmpf ogt, %181, %402 : vector<8x256xf32>
      %cst_86 = arith.constant 0.000000e+00 : f32
      %404 = vector.broadcast %cst_86 : f32 to vector<8x256xf32>
      %405 = arith.select %403, %186, %404 : vector<8x256xi1>, vector<8x256xf32>
      %cst_87 = arith.constant dense<0.000000e+00> : vector<8xf32>
      %406 = vector.multi_reduction <add>, %405, %cst_87 [1] : vector<8x256xf32> to vector<8xf32>
      %407 = vector.shape_cast %406 : vector<8xf32> to vector<8x1xf32>
      %408 = arith.cmpf ogt, %407, %190 : vector<8x1xf32>
      %409 = arith.select %408, %401, %397 : vector<8x1xi1>, vector<8x1xf32>
      %410 = arith.select %408, %398, %401 : vector<8x1xi1>, vector<8x1xf32>
      %411 = arith.addf %409, %410 : vector<8x1xf32>
      %cst_88 = arith.constant 5.000000e-01 : f32
      %412 = vector.broadcast %cst_88 : f32 to vector<8x1xf32>
      %413 = arith.mulf %412, %411 : vector<8x1xf32>
      %414 = vector.broadcast %413 : vector<8x1xf32> to vector<8x256xf32>
      %415 = arith.cmpf ogt, %181, %414 : vector<8x256xf32>
      %cst_89 = arith.constant 0.000000e+00 : f32
      %416 = vector.broadcast %cst_89 : f32 to vector<8x256xf32>
      %417 = arith.select %415, %186, %416 : vector<8x256xi1>, vector<8x256xf32>
      %cst_90 = arith.constant dense<0.000000e+00> : vector<8xf32>
      %418 = vector.multi_reduction <add>, %417, %cst_90 [1] : vector<8x256xf32> to vector<8xf32>
      %419 = vector.shape_cast %418 : vector<8xf32> to vector<8x1xf32>
      %420 = arith.cmpf ogt, %419, %190 : vector<8x1xf32>
      %421 = arith.select %420, %413, %409 : vector<8x1xi1>, vector<8x1xf32>
      %422 = arith.select %420, %410, %413 : vector<8x1xi1>, vector<8x1xf32>
      %423 = arith.addf %421, %422 : vector<8x1xf32>
      %cst_91 = arith.constant 5.000000e-01 : f32
      %424 = vector.broadcast %cst_91 : f32 to vector<8x1xf32>
      %425 = arith.mulf %424, %423 : vector<8x1xf32>
      %426 = vector.broadcast %425 : vector<8x1xf32> to vector<8x256xf32>
      %427 = arith.cmpf ogt, %181, %426 : vector<8x256xf32>
      %cst_92 = arith.constant 0.000000e+00 : f32
      %428 = vector.broadcast %cst_92 : f32 to vector<8x256xf32>
      %429 = arith.select %427, %186, %428 : vector<8x256xi1>, vector<8x256xf32>
      %cst_93 = arith.constant dense<0.000000e+00> : vector<8xf32>
      %430 = vector.multi_reduction <add>, %429, %cst_93 [1] : vector<8x256xf32> to vector<8xf32>
      %431 = vector.shape_cast %430 : vector<8xf32> to vector<8x1xf32>
      %432 = arith.cmpf ogt, %431, %190 : vector<8x1xf32>
      %433 = arith.select %432, %425, %421 : vector<8x1xi1>, vector<8x1xf32>
      %434 = arith.select %432, %422, %425 : vector<8x1xi1>, vector<8x1xf32>
      %435 = arith.addf %433, %434 : vector<8x1xf32>
      %cst_94 = arith.constant 5.000000e-01 : f32
      %436 = vector.broadcast %cst_94 : f32 to vector<8x1xf32>
      %437 = arith.mulf %436, %435 : vector<8x1xf32>
      %438 = vector.broadcast %437 : vector<8x1xf32> to vector<8x256xf32>
      %439 = arith.cmpf ogt, %181, %438 : vector<8x256xf32>
      %cst_95 = arith.constant 0.000000e+00 : f32
      %440 = vector.broadcast %cst_95 : f32 to vector<8x256xf32>
      %441 = arith.select %439, %186, %440 : vector<8x256xi1>, vector<8x256xf32>
      %cst_96 = arith.constant dense<0.000000e+00> : vector<8xf32>
      %442 = vector.multi_reduction <add>, %441, %cst_96 [1] : vector<8x256xf32> to vector<8xf32>
      %443 = vector.shape_cast %442 : vector<8xf32> to vector<8x1xf32>
      %444 = arith.cmpf ogt, %443, %190 : vector<8x1xf32>
      %445 = arith.select %444, %437, %433 : vector<8x1xi1>, vector<8x1xf32>
      %446 = arith.select %444, %434, %437 : vector<8x1xi1>, vector<8x1xf32>
      %447 = arith.addf %445, %446 : vector<8x1xf32>
      %cst_97 = arith.constant 5.000000e-01 : f32
      %448 = vector.broadcast %cst_97 : f32 to vector<8x1xf32>
      %449 = arith.mulf %448, %447 : vector<8x1xf32>
      %450 = vector.broadcast %449 : vector<8x1xf32> to vector<8x256xf32>
      %451 = arith.cmpf ogt, %181, %450 : vector<8x256xf32>
      %cst_98 = arith.constant 0.000000e+00 : f32
      %452 = vector.broadcast %cst_98 : f32 to vector<8x256xf32>
      %453 = arith.select %451, %186, %452 : vector<8x256xi1>, vector<8x256xf32>
      %cst_99 = arith.constant dense<0.000000e+00> : vector<8xf32>
      %454 = vector.multi_reduction <add>, %453, %cst_99 [1] : vector<8x256xf32> to vector<8xf32>
      %455 = vector.shape_cast %454 : vector<8xf32> to vector<8x1xf32>
      %456 = arith.cmpf ogt, %455, %190 : vector<8x1xf32>
      %457 = arith.select %456, %449, %445 : vector<8x1xi1>, vector<8x1xf32>
      %458 = arith.select %456, %446, %449 : vector<8x1xi1>, vector<8x1xf32>
      %459 = arith.addf %457, %458 : vector<8x1xf32>
      %cst_100 = arith.constant 5.000000e-01 : f32
      %460 = vector.broadcast %cst_100 : f32 to vector<8x1xf32>
      %461 = arith.mulf %460, %459 : vector<8x1xf32>
      %462 = vector.broadcast %461 : vector<8x1xf32> to vector<8x256xf32>
      %463 = arith.cmpf ogt, %181, %462 : vector<8x256xf32>
      %cst_101 = arith.constant 0.000000e+00 : f32
      %464 = vector.broadcast %cst_101 : f32 to vector<8x256xf32>
      %465 = arith.select %463, %186, %464 : vector<8x256xi1>, vector<8x256xf32>
      %cst_102 = arith.constant dense<0.000000e+00> : vector<8xf32>
      %466 = vector.multi_reduction <add>, %465, %cst_102 [1] : vector<8x256xf32> to vector<8xf32>
      %467 = vector.shape_cast %466 : vector<8xf32> to vector<8x1xf32>
      %468 = arith.cmpf ogt, %467, %190 : vector<8x1xf32>
      %469 = arith.select %468, %461, %457 : vector<8x1xi1>, vector<8x1xf32>
      %470 = arith.select %468, %458, %461 : vector<8x1xi1>, vector<8x1xf32>
      %471 = arith.addf %469, %470 : vector<8x1xf32>
      %cst_103 = arith.constant 5.000000e-01 : f32
      %472 = vector.broadcast %cst_103 : f32 to vector<8x1xf32>
      %473 = arith.mulf %472, %471 : vector<8x1xf32>
      %474 = vector.broadcast %473 : vector<8x1xf32> to vector<8x256xf32>
      %475 = arith.cmpf ogt, %181, %474 : vector<8x256xf32>
      %cst_104 = arith.constant 0.000000e+00 : f32
      %476 = vector.broadcast %cst_104 : f32 to vector<8x256xf32>
      %477 = arith.select %475, %186, %476 : vector<8x256xi1>, vector<8x256xf32>
      %cst_105 = arith.constant dense<0.000000e+00> : vector<8xf32>
      %478 = vector.multi_reduction <add>, %477, %cst_105 [1] : vector<8x256xf32> to vector<8xf32>
      %479 = vector.shape_cast %478 : vector<8xf32> to vector<8x1xf32>
      %480 = arith.cmpf ogt, %479, %190 : vector<8x1xf32>
      %481 = arith.select %480, %473, %469 : vector<8x1xi1>, vector<8x1xf32>
      %482 = arith.select %480, %470, %473 : vector<8x1xi1>, vector<8x1xf32>
      %483 = arith.addf %481, %482 : vector<8x1xf32>
      %cst_106 = arith.constant 5.000000e-01 : f32
      %484 = vector.broadcast %cst_106 : f32 to vector<8x1xf32>
      %485 = arith.mulf %484, %483 : vector<8x1xf32>
      %486 = vector.broadcast %485 : vector<8x1xf32> to vector<8x256xf32>
      %487 = arith.cmpf ogt, %181, %486 : vector<8x256xf32>
      %cst_107 = arith.constant 0.000000e+00 : f32
      %488 = vector.broadcast %cst_107 : f32 to vector<8x256xf32>
      %489 = arith.select %487, %186, %488 : vector<8x256xi1>, vector<8x256xf32>
      %cst_108 = arith.constant dense<0.000000e+00> : vector<8xf32>
      %490 = vector.multi_reduction <add>, %489, %cst_108 [1] : vector<8x256xf32> to vector<8xf32>
      %491 = vector.shape_cast %490 : vector<8xf32> to vector<8x1xf32>
      %492 = arith.cmpf ogt, %491, %190 : vector<8x1xf32>
      %493 = arith.select %492, %485, %481 : vector<8x1xi1>, vector<8x1xf32>
      %494 = arith.select %492, %482, %485 : vector<8x1xi1>, vector<8x1xf32>
      %495 = arith.addf %493, %494 : vector<8x1xf32>
      %cst_109 = arith.constant 5.000000e-01 : f32
      %496 = vector.broadcast %cst_109 : f32 to vector<8x1xf32>
      %497 = arith.mulf %496, %495 : vector<8x1xf32>
      %498 = vector.broadcast %497 : vector<8x1xf32> to vector<8x256xf32>
      %499 = arith.cmpf ogt, %181, %498 : vector<8x256xf32>
      %cst_110 = arith.constant 0.000000e+00 : f32
      %500 = vector.broadcast %cst_110 : f32 to vector<8x256xf32>
      %501 = arith.select %499, %186, %500 : vector<8x256xi1>, vector<8x256xf32>
      %cst_111 = arith.constant dense<0.000000e+00> : vector<8xf32>
      %502 = vector.multi_reduction <add>, %501, %cst_111 [1] : vector<8x256xf32> to vector<8xf32>
      %503 = vector.shape_cast %502 : vector<8xf32> to vector<8x1xf32>
      %504 = arith.cmpf ogt, %503, %190 : vector<8x1xf32>
      %505 = arith.select %504, %497, %493 : vector<8x1xi1>, vector<8x1xf32>
      %506 = arith.select %504, %494, %497 : vector<8x1xi1>, vector<8x1xf32>
      %507 = arith.addf %505, %506 : vector<8x1xf32>
      %cst_112 = arith.constant 5.000000e-01 : f32
      %508 = vector.broadcast %cst_112 : f32 to vector<8x1xf32>
      %509 = arith.mulf %508, %507 : vector<8x1xf32>
      %510 = vector.broadcast %509 : vector<8x1xf32> to vector<8x256xf32>
      %511 = arith.cmpf ogt, %181, %510 : vector<8x256xf32>
      %cst_113 = arith.constant 0.000000e+00 : f32
      %512 = vector.broadcast %cst_113 : f32 to vector<8x256xf32>
      %513 = arith.select %511, %186, %512 : vector<8x256xi1>, vector<8x256xf32>
      %cst_114 = arith.constant dense<0.000000e+00> : vector<8xf32>
      %514 = vector.multi_reduction <add>, %513, %cst_114 [1] : vector<8x256xf32> to vector<8xf32>
      %515 = vector.shape_cast %514 : vector<8xf32> to vector<8x1xf32>
      %516 = arith.cmpf ogt, %515, %190 : vector<8x1xf32>
      %517 = arith.select %516, %509, %505 : vector<8x1xi1>, vector<8x1xf32>
      %518 = arith.select %516, %506, %509 : vector<8x1xi1>, vector<8x1xf32>
      %519 = arith.addf %517, %518 : vector<8x1xf32>
      %cst_115 = arith.constant 5.000000e-01 : f32
      %520 = vector.broadcast %cst_115 : f32 to vector<8x1xf32>
      %521 = arith.mulf %520, %519 : vector<8x1xf32>
      %522 = vector.broadcast %521 : vector<8x1xf32> to vector<8x256xf32>
      %523 = arith.cmpf ogt, %181, %522 : vector<8x256xf32>
      %cst_116 = arith.constant 0.000000e+00 : f32
      %524 = vector.broadcast %cst_116 : f32 to vector<8x256xf32>
      %525 = arith.select %523, %186, %524 : vector<8x256xi1>, vector<8x256xf32>
      %cst_117 = arith.constant dense<0.000000e+00> : vector<8xf32>
      %526 = vector.multi_reduction <add>, %525, %cst_117 [1] : vector<8x256xf32> to vector<8xf32>
      %527 = vector.shape_cast %526 : vector<8xf32> to vector<8x1xf32>
      %528 = arith.cmpf ogt, %527, %190 : vector<8x1xf32>
      %529 = arith.select %528, %521, %517 : vector<8x1xi1>, vector<8x1xf32>
      %530 = arith.select %528, %518, %521 : vector<8x1xi1>, vector<8x1xf32>
      %531 = arith.addf %529, %530 : vector<8x1xf32>
      %cst_118 = arith.constant 5.000000e-01 : f32
      %532 = vector.broadcast %cst_118 : f32 to vector<8x1xf32>
      %533 = arith.mulf %532, %531 : vector<8x1xf32>
      %534 = vector.broadcast %533 : vector<8x1xf32> to vector<8x256xf32>
      %535 = arith.cmpf ogt, %181, %534 : vector<8x256xf32>
      %cst_119 = arith.constant 0.000000e+00 : f32
      %536 = vector.broadcast %cst_119 : f32 to vector<8x256xf32>
      %537 = arith.select %535, %186, %536 : vector<8x256xi1>, vector<8x256xf32>
      %cst_120 = arith.constant dense<0.000000e+00> : vector<8xf32>
      %538 = vector.multi_reduction <add>, %537, %cst_120 [1] : vector<8x256xf32> to vector<8xf32>
      %539 = vector.shape_cast %538 : vector<8xf32> to vector<8x1xf32>
      %540 = arith.cmpf ogt, %539, %190 : vector<8x1xf32>
      %541 = arith.select %540, %533, %529 : vector<8x1xi1>, vector<8x1xf32>
      %542 = arith.select %540, %530, %533 : vector<8x1xi1>, vector<8x1xf32>
      %543 = arith.addf %541, %542 : vector<8x1xf32>
      %cst_121 = arith.constant 5.000000e-01 : f32
      %544 = vector.broadcast %cst_121 : f32 to vector<8x1xf32>
      %545 = arith.mulf %544, %543 : vector<8x1xf32>
      %546 = vector.broadcast %545 : vector<8x1xf32> to vector<8x256xf32>
      %547 = arith.cmpf ogt, %181, %546 : vector<8x256xf32>
      %cst_122 = arith.constant 0.000000e+00 : f32
      %548 = vector.broadcast %cst_122 : f32 to vector<8x256xf32>
      %549 = arith.select %547, %186, %548 : vector<8x256xi1>, vector<8x256xf32>
      %cst_123 = arith.constant dense<0.000000e+00> : vector<8xf32>
      %550 = vector.multi_reduction <add>, %549, %cst_123 [1] : vector<8x256xf32> to vector<8xf32>
      %551 = vector.shape_cast %550 : vector<8xf32> to vector<8x1xf32>
      %552 = arith.cmpf ogt, %551, %190 : vector<8x1xf32>
      %553 = arith.select %552, %545, %541 : vector<8x1xi1>, vector<8x1xf32>
      %554 = arith.select %552, %542, %545 : vector<8x1xi1>, vector<8x1xf32>
      %555 = vector.broadcast %553 : vector<8x1xf32> to vector<8x256xf32>
      %556 = arith.cmpf ogt, %181, %555 : vector<8x256xf32>
      %557 = arith.index_cast %arg8 : i32 to index
      %c0_124 = arith.constant 0 : index
      %c0_125 = arith.constant 0 : index
      %558 = vector.load %arg4[%557, %c0_124, %c0_125] : memref<16x8x256xf32, #tpu.memory_space<vmem>>, vector<1x8x256xf32>
      %559 = vector.shape_cast %558 : vector<1x8x256xf32> to vector<8x256xf32>
      %cst_126 = arith.constant 1.42857146 : f32
      %560 = vector.broadcast %cst_126 : f32 to vector<8x256xf32>
      %561 = arith.mulf %181, %560 : vector<8x256xf32>
      %562 = arith.addf %561, %559 : vector<8x256xf32>
      %cst_127 = arith.constant -1.000000e+30 : f32
      %563 = vector.broadcast %cst_127 : f32 to vector<8x256xf32>
      %564 = arith.select %556, %562, %563 : vector<8x256xi1>, vector<8x256xf32>
      %cst_128 = arith.constant dense<0xFF800000> : vector<8xf32>
      %565 = vector.multi_reduction <maximumf>, %564, %cst_128 [1] : vector<8x256xf32> to vector<8xf32>
      %566 = vector.shape_cast %565 : vector<8xf32> to vector<8x1xf32>
      %567 = vector.broadcast %566 : vector<8x1xf32> to vector<8x256xf32>
      %568 = arith.cmpf oge, %564, %567 : vector<8x256xf32>
      %c256_i32 = arith.constant 256 : i32
      %569 = vector.broadcast %c256_i32 : i32 to vector<8x256xi32>
      %570 = arith.select %568, %2, %569 : vector<8x256xi1>, vector<8x256xi32>
      %cst_129 = arith.constant dense<2147483647> : vector<8xi32>
      %571 = vector.multi_reduction <minsi>, %570, %cst_129 [1] : vector<8x256xi32> to vector<8xi32>
      %572 = vector.shape_cast %571 : vector<8xi32> to vector<8x1xi32>
      %573 = vector.broadcast %arg8 : i32 to vector<8x1xi32>
      %574 = arith.cmpi sge, %573, %1 : vector<8x1xi32>
      %575 = vector.broadcast %arg8 : i32 to vector<8x16xi32>
      %576 = arith.cmpi eq, %3, %575 : vector<8x16xi32>
      %577 = vector.broadcast %574 : vector<8x1xi1> to vector<8x16xi1>
      %578 = arith.andi %576, %577 : vector<8x16xi1>
      %579 = vector.shape_cast %572 : vector<8x1xi32> to vector<8x1xi32>
      %580 = vector.broadcast %579 : vector<8x1xi32> to vector<8x16xi32>
      %581 = arith.select %578, %580, %arg10 : vector<8x16xi1>, vector<8x16xi32>
      %582 = vector.broadcast %572 : vector<8x1xi32> to vector<8x256xi32>
      %583 = arith.cmpi eq, %2, %582 : vector<8x256xi32>
      %584 = vector.broadcast %574 : vector<8x1xi1> to vector<8x256xi1>
      %585 = arith.andi %584, %583 : vector<8x256xi1>
      %cst_130 = arith.constant 1.000000e+00 : f32
      %cst_131 = arith.constant 0.000000e+00 : f32
      %586 = vector.broadcast %cst_130 : f32 to vector<8x256xf32>
      %587 = vector.broadcast %cst_131 : f32 to vector<8x256xf32>
      %588 = arith.select %585, %586, %587 : vector<8x256xi1>, vector<8x256xf32>
      %589 = arith.addf %arg9, %588 : vector<8x256xf32>
      scf.yield %589, %581 : vector<8x256xf32>, vector<8x16xi32>
    }
    %c0_19 = arith.constant 0 : index
    %c0_20 = arith.constant 0 : index
    %169 = vector.load %arg7[%c0_19, %c0_20] : memref<8x16xi32, #tpu.memory_space<vmem>>, vector<8x16xi32>
    tpu.vector_store %arg7[%c0_19, %c0_20], %168#1 {strides = array<i32>} : memref<8x16xi32, #tpu.memory_space<vmem>>, vector<8x16xi32>,
    return
  }
  func.func @transform_0(%arg0: i32) -> i32 {
    %c0_i32 = arith.constant 0 : i32
    %c0_i32_0 = arith.constant 0 : i32
    return %c0_i32 : i32
  }
  func.func @transform_1(%arg0: i32) -> (i32, i32) {
    %c0_i32 = arith.constant 0 : i32
    %c0_i32_0 = arith.constant 0 : i32
    return %arg0, %c0_i32 : i32, i32
  }
  func.func @transform_2(%arg0: i32) -> (i32, i32) {
    %c0_i32 = arith.constant 0 : i32
    %c0_i32_0 = arith.constant 0 : i32
    return %arg0, %c0_i32 : i32, i32
  }
  func.func @transform_3(%arg0: i32) -> (i32, i32, i32) {
    %c0_i32 = arith.constant 0 : i32
    %c0_i32_0 = arith.constant 0 : i32
    %c0_i32_1 = arith.constant 0 : i32
    return %c0_i32, %arg0, %c0_i32_0 : i32, i32, i32
  }
  func.func @transform_4(%arg0: i32) -> (i32, i32) {
    %c0_i32 = arith.constant 0 : i32
    %c0_i32_0 = arith.constant 0 : i32
    %c0_i32_1 = arith.constant 0 : i32
    return %c0_i32, %c0_i32_0 : i32, i32
  }
  func.func @transform_5(%arg0: i32) -> (i32, i32) {
    %c0_i32 = arith.constant 0 : i32
    %c0_i32_0 = arith.constant 0 : i32
    %c0_i32_1 = arith.constant 0 : i32
    return %c0_i32, %c0_i32_0 : i32, i32
  }
  func.func @transform_6(%arg0: i32) -> (i32, i32) {
    %c0_i32 = arith.constant 0 : i32
    %c0_i32_0 = arith.constant 0 : i32
    return %arg0, %c0_i32 : i32, i32
  }
}

</mosaic_0001>

<llo_original>
// kernel: tpu_custom_call.1
$region0: #{tpu_custom_call.1}
  #allocation0 [shape = 'u32[]', space=smem, size = 0x4, offset = 0x4, fixed_abs, tag = 'smem constant byte address 0x4 - core index']
  #allocation1 [shape = 'u32[72,128]{1,0:T(1,128)}', space=vmem, size = 0x9000, scoped, tag = 'internal scratch']
  #allocation2 [shape = 's32[1]{0:T(128)S(6)}', space=smem, size = 0x200, scoped, tag = 'scoped memory for tpu_custom_call.1']
  %s0 = inlined_call_operand.<no memory space> [shape: s32[1], index: 0, kind: input, shape index: {}]
  %s1 = inlined_call_operand.vmem [shape: s32[8,1], index: 1, kind: input, shape index: {}]
  %s2 = inlined_call_operand.vmem [shape: s32[8,16], index: 2, kind: input, shape index: {}]
  %s3 = inlined_call_operand.hbm [shape: f32[16,8,256], index: 3, kind: input, shape index: {}]
  %s4 = inlined_call_operand.hbm [shape: bf16[256,128], index: 4, kind: input, shape index: {}]
  %s5 = inlined_call_operand.hbm [shape: bf16[128,256], index: 5, kind: input, shape index: {}]
  %s6 = inlined_call_operand.hbm [shape: s32[8,16], index: 6, kind: output, shape index: {}]
  %s7 = sld [smem:[#allocation0]]
  $region53: #{tpu_custom_call.1} parent=0
    _
  %s9 = ssub.s32 1, %s7
  %s10 = scalar_select 0, %s9, %s7
  %11 = sst [smem:[#allocation2]] %s0
  $region1: #{tpu_custom_call.1} parent=0
    #allocation3 [shape = 'u8[131072]{0}', space=vmem, size = 0x20000, scoped, tag = 'input window, operand 3, single buffered']
    #allocation4 [shape = 's32[1]{0}', space=sflag, size = 0x4, scoped, tag = 'scoped memory for tpu_custom_call.1']
    #allocation5 [shape = 's32[1]{0}', space=sflag, size = 0x4, scoped, tag = 'scoped memory for tpu_custom_call.1']
    #allocation6 [shape = 'u8[65536]{0}', space=vmem, size = 0x10000, scoped, tag = 'input window, operand 4, single buffered']
    #allocation7 [shape = 's32[1]{0}', space=sflag, size = 0x4, scoped, tag = 'scoped memory for tpu_custom_call.1']
    #allocation8 [shape = 'u8[65536]{0}', space=vmem, size = 0x10000, scoped, tag = 'input window, operand 5, single buffered']
    #allocation9 [shape = 'u8[4096]{0}', space=vmem, size = 0x1000, scoped, tag = 'output window, operand 0, single buffered']
    %12 = vsyncpa [#allocation4], 0
    %13 = vsyncpa [#allocation7], 0
    %14 = vsyncpa [#allocation5], 0
    // Predicated region
    $region2: #{tpu_custom_call.1} parent=1 // pred_check
      _
    $region3: #{tpu_custom_call.1} parent=1 // pred_check_branch
      %16 = sbr.rel (0) target = $region5
    $region4: #{tpu_custom_call.1} parent=1 // pred_region
      _
    $region5: #{tpu_custom_call.1} parent=1 // pred_fallthru
      _
    // Predicated region
    $region6: #{tpu_custom_call.1} parent=1 // pred_check
      _
    $region7: #{tpu_custom_call.1} parent=1 // pred_check_branch
      %18 = sbr.rel (0) target = $region9
    $region8: #{tpu_custom_call.1} parent=1 // pred_region
      _
    $region9: #{tpu_custom_call.1} parent=1 // pred_fallthru
      _
    // Predicated region
    $region10: #{tpu_custom_call.1} parent=1 // pred_check
      _
    $region11: #{tpu_custom_call.1} parent=1 // pred_check_branch
      %20 = sbr.rel (0) target = $region13
    $region12: #{tpu_custom_call.1} parent=1 // pred_region
      _
    $region13: #{tpu_custom_call.1} parent=1 // pred_fallthru
      _
    // Predicated region
    $region14: #{tpu_custom_call.1} parent=1 // pred_check
      _
    $region15: #{tpu_custom_call.1} parent=1 // pred_check_branch
      %22 = sbr.rel (0) target = $region17
    $region16: #{tpu_custom_call.1} parent=1 // pred_region
      %24 = vsyncadd [#allocation4], 0
      %s25 = sshll.u32 %s3, 4
      %s26 = int_to_ptr.hbm [resolvable:$true] %s25
      %s27 = sshll.u32 [#allocation3], 4
      %s28 = int_to_ptr.vmem [resolvable:$true] %s27
      %33 = dma.hbm_to_vmem [thread:$0]  %s26, 4096, %s28, [#allocation4], 256, 256, 16
    $region17: #{tpu_custom_call.1} parent=1 // pred_fallthru
      _
    // Predicated region
    $region18: #{tpu_custom_call.1} parent=1 // pred_check
      _
    $region19: #{tpu_custom_call.1} parent=1 // pred_check_branch
      %35 = sbr.rel (0) target = $region21
    $region20: #{tpu_custom_call.1} parent=1 // pred_region
      %37 = vsyncadd [#allocation7], 0
      %s38 = sshll.u32 %s4, 4
      %s39 = int_to_ptr.hbm [resolvable:$true] %s38
      %s40 = sshll.u32 [#allocation6], 4
      %s41 = int_to_ptr.vmem [resolvable:$true] %s40
      %46 = dma.hbm_to_vmem [thread:$0]  %s39, 2048, %s41, [#allocation7], 64, 64, 4
    $region21: #{tpu_custom_call.1} parent=1 // pred_fallthru
      _
    // Predicated region
    $region22: #{tpu_custom_call.1} parent=1 // pred_check
      _
    $region23: #{tpu_custom_call.1} parent=1 // pred_check_branch
      %48 = sbr.rel (0) target = $region25
    $region24: #{tpu_custom_call.1} parent=1 // pred_region
      %50 = vsyncadd [#allocation7], 0
      %s51 = sshll.u32 %s5, 4
      %s52 = int_to_ptr.hbm [resolvable:$true] %s51
      %s53 = sshll.u32 [#allocation8], 4
      %s54 = int_to_ptr.vmem [resolvable:$true] %s53
      %59 = dma.hbm_to_vmem [thread:$0]  %s52, 2048, %s54, [#allocation7], 128, 128, 8
    $region25: #{tpu_custom_call.1} parent=1 // pred_fallthru
      _
    // Predicated region
    $region26: #{tpu_custom_call.1} parent=1 // pred_check
      _
    $region27: #{tpu_custom_call.1} parent=1 // pred_check_branch
      %61 = sbr.rel (0) target = $region29
    $region28: #{tpu_custom_call.1} parent=1 // pred_region
      %63 = dma.done [#allocation4], 4096
    $region29: #{tpu_custom_call.1} parent=1 // pred_fallthru
      _
    // Predicated region
    $region30: #{tpu_custom_call.1} parent=1 // pred_check
      _
    $region31: #{tpu_custom_call.1} parent=1 // pred_check_branch
      %65 = sbr.rel (0) target = $region33
    $region32: #{tpu_custom_call.1} parent=1 // pred_region
      %67 = dma.done [#allocation7], 2048
    $region33: #{tpu_custom_call.1} parent=1 // pred_fallthru
      _
    // Predicated region
    $region34: #{tpu_custom_call.1} parent=1 // pred_check
      _
    $region35: #{tpu_custom_call.1} parent=1 // pred_check_branch
      %69 = sbr.rel (0) target = $region37
    $region36: #{tpu_custom_call.1} parent=1 // pred_region
      %71 = dma.done [#allocation7], 2048
    $region37: #{tpu_custom_call.1} parent=1 // pred_fallthru
      _
    %v72 = vld [vmem:[%s2] sm:$0xff]
    %v73 = vld [vmem:[%s1] sm:$0xff]
    %v74 = vlaneseq
    %v75 = vand.u32 %v74, 127
    %v76 = vadd.s32 %v75, 128
    %77 = vset.pattern.permute.xlu0 0
    %78 = vperm.xlu0 %77, %v72
    %v79 = vpop.permute.xlu0 %78
    %vm80 = vcmp.eq.s32.totalorder %v75, %v79
    %vm81 = vcmp.eq.s32.totalorder %v76, %v79
    %vm82 = vcmp.ne.s32.totalorder %v72, 4294967295
    %v83 = vsel %vm82, 1, 0
    %84 = vset.pattern.permute.xlu0 0
    %85 = vperm.xlu0 %84, %v83
    %v86 = vpop.permute.xlu0 %85
    %vm87 = vcmp.eq.s32.totalorder %v86, 1
    %vm88 = vmand %vm80, %vm87
    %vm89 = vmand %vm81, %vm87
    %v90 = vsel %vm88, 1, 0
    %v91 = vsel %vm89, 1, 0
    %v92 = vcvt.s32.f32 %v90
    %v93 = vcvt.s32.f32 %v91
    %v94 = vadd.f32 %v92, 0.0
    %v95 = vadd.f32 %v93, 0.0
    %96 = vset.pattern.permute.xlu0 1
    %97 = vperm.xlu0 %96, %v72
    %v98 = vpop.permute.xlu0 %97
    %vm99 = vcmp.eq.s32.totalorder %v75, %v98
    %vm100 = vcmp.eq.s32.totalorder %v76, %v98
    %101 = vset.pattern.permute.xlu0 1
    %102 = vperm.xlu0 %101, %v83
    %v103 = vpop.permute.xlu0 %102
    %vm104 = vcmp.eq.s32.totalorder %v103, 1
    %vm105 = vmand %vm99, %vm104
    %vm106 = vmand %vm100, %vm104
    %v107 = vsel %vm105, 1, 0
    %v108 = vsel %vm106, 1, 0
    %v109 = vcvt.s32.f32 %v107
    %v110 = vcvt.s32.f32 %v108
    %v111 = vadd.f32 %v94, %v109
    %v112 = vadd.f32 %v95, %v110
    %113 = vset.pattern.permute.xlu0 2
    %114 = vperm.xlu0 %113, %v72
    %v115 = vpop.permute.xlu0 %114
    %vm116 = vcmp.eq.s32.totalorder %v75, %v115
    %vm117 = vcmp.eq.s32.totalorder %v76, %v115
    %118 = vset.pattern.permute.xlu0 2
    %119 = vperm.xlu0 %118, %v83
    %v120 = vpop.permute.xlu0 %119
    %vm121 = vcmp.eq.s32.totalorder %v120, 1
    %vm122 = vmand %vm116, %vm121
    %vm123 = vmand %vm117, %vm121
    %v124 = vsel %vm122, 1, 0
    %v125 = vsel %vm123, 1, 0
    %v126 = vcvt.s32.f32 %v124
    %v127 = vcvt.s32.f32 %v125
    %v128 = vadd.f32 %v111, %v126
    %v129 = vadd.f32 %v112, %v127
    %130 = vset.pattern.permute.xlu0 3
    %131 = vperm.xlu0 %130, %v72
    %v132 = vpop.permute.xlu0 %131
    %vm133 = vcmp.eq.s32.totalorder %v75, %v132
    %vm134 = vcmp.eq.s32.totalorder %v76, %v132
    %135 = vset.pattern.permute.xlu0 3
    %136 = vperm.xlu0 %135, %v83
    %v137 = vpop.permute.xlu0 %136
    %vm138 = vcmp.eq.s32.totalorder %v137, 1
    %vm139 = vmand %vm133, %vm138
    %vm140 = vmand %vm134, %vm138
    %v141 = vsel %vm139, 1, 0
    %v142 = vsel %vm140, 1, 0
    %v143 = vcvt.s32.f32 %v141
    %v144 = vcvt.s32.f32 %v142
    %v145 = vadd.f32 %v128, %v143
    %v146 = vadd.f32 %v129, %v144
    %147 = vset.pattern.permute.xlu0 4
    %148 = vperm.xlu0 %147, %v72
    %v149 = vpop.permute.xlu0 %148
    %vm150 = vcmp.eq.s32.totalorder %v75, %v149
    %vm151 = vcmp.eq.s32.totalorder %v76, %v149
    %152 = vset.pattern.permute.xlu0 4
    %153 = vperm.xlu0 %152, %v83
    %v154 = vpop.permute.xlu0 %153
    %vm155 = vcmp.eq.s32.totalorder %v154, 1
    %vm156 = vmand %vm150, %vm155
    %vm157 = vmand %vm151, %vm155
    %v158 = vsel %vm156, 1, 0
    %v159 = vsel %vm157, 1, 0
    %v160 = vcvt.s32.f32 %v158
    %v161 = vcvt.s32.f32 %v159
    %v162 = vadd.f32 %v145, %v160
    %v163 = vadd.f32 %v146, %v161
    %164 = vset.pattern.permute.xlu0 5
    %165 = vperm.xlu0 %164, %v72
    %v166 = vpop.permute.xlu0 %165
    %vm167 = vcmp.eq.s32.totalorder %v75, %v166
    %vm168 = vcmp.eq.s32.totalorder %v76, %v166
    %169 = vset.pattern.permute.xlu0 5
    %170 = vperm.xlu0 %169, %v83
    %v171 = vpop.permute.xlu0 %170
    %vm172 = vcmp.eq.s32.totalorder %v171, 1
    %vm173 = vmand %vm167, %vm172
    %vm174 = vmand %vm168, %vm172
    %v175 = vsel %vm173, 1, 0
    %v176 = vsel %vm174, 1, 0
    %v177 = vcvt.s32.f32 %v175
    %v178 = vcvt.s32.f32 %v176
    %v179 = vadd.f32 %v162, %v177
    %v180 = vadd.f32 %v163, %v178
    %181 = vset.pattern.permute.xlu0 6
    %182 = vperm.xlu0 %181, %v72
    %v183 = vpop.permute.xlu0 %182
    %vm184 = vcmp.eq.s32.totalorder %v75, %v183
    %vm185 = vcmp.eq.s32.totalorder %v76, %v183
    %186 = vset.pattern.permute.xlu0 6
    %187 = vperm.xlu0 %186, %v83
    %v188 = vpop.permute.xlu0 %187
    %vm189 = vcmp.eq.s32.totalorder %v188, 1
    %vm190 = vmand %vm184, %vm189
    %vm191 = vmand %vm185, %vm189
    %v192 = vsel %vm190, 1, 0
    %v193 = vsel %vm191, 1, 0
    %v194 = vcvt.s32.f32 %v192
    %v195 = vcvt.s32.f32 %v193
    %v196 = vadd.f32 %v179, %v194
    %v197 = vadd.f32 %v180, %v195
    %198 = vset.pattern.permute.xlu0 7
    %199 = vperm.xlu0 %198, %v72
    %v200 = vpop.permute.xlu0 %199
    %vm201 = vcmp.eq.s32.totalorder %v75, %v200
    %vm202 = vcmp.eq.s32.totalorder %v76, %v200
    %203 = vset.pattern.permute.xlu0 7
    %204 = vperm.xlu0 %203, %v83
    %v205 = vpop.permute.xlu0 %204
    %vm206 = vcmp.eq.s32.totalorder %v205, 1
    %vm207 = vmand %vm201, %vm206
    %vm208 = vmand %vm202, %vm206
    %v209 = vsel %vm207, 1, 0
    %v210 = vsel %vm208, 1, 0
    %v211 = vcvt.s32.f32 %v209
    %v212 = vcvt.s32.f32 %v210
    %v213 = vadd.f32 %v196, %v211
    %v214 = vadd.f32 %v197, %v212
    %215 = vset.pattern.permute.xlu0 8
    %216 = vperm.xlu0 %215, %v72
    %v217 = vpop.permute.xlu0 %216
    %vm218 = vcmp.eq.s32.totalorder %v75, %v217
    %vm219 = vcmp.eq.s32.totalorder %v76, %v217
    %220 = vset.pattern.permute.xlu0 8
    %221 = vperm.xlu0 %220, %v83
    %v222 = vpop.permute.xlu0 %221
    %vm223 = vcmp.eq.s32.totalorder %v222, 1
    %vm224 = vmand %vm218, %vm223
    %vm225 = vmand %vm219, %vm223
    %v226 = vsel %vm224, 1, 0
    %v227 = vsel %vm225, 1, 0
    %v228 = vcvt.s32.f32 %v226
    %v229 = vcvt.s32.f32 %v227
    %v230 = vadd.f32 %v213, %v228
    %v231 = vadd.f32 %v214, %v229
    %232 = vset.pattern.permute.xlu0 9
    %233 = vperm.xlu0 %232, %v72
    %v234 = vpop.permute.xlu0 %233
    %vm235 = vcmp.eq.s32.totalorder %v75, %v234
    %vm236 = vcmp.eq.s32.totalorder %v76, %v234
    %237 = vset.pattern.permute.xlu0 9
    %238 = vperm.xlu0 %237, %v83
    %v239 = vpop.permute.xlu0 %238
    %vm240 = vcmp.eq.s32.totalorder %v239, 1
    %vm241 = vmand %vm235, %vm240
    %vm242 = vmand %vm236, %vm240
    %v243 = vsel %vm241, 1, 0
    %v244 = vsel %vm242, 1, 0
    %v245 = vcvt.s32.f32 %v243
    %v246 = vcvt.s32.f32 %v244
    %v247 = vadd.f32 %v230, %v245
    %v248 = vadd.f32 %v231, %v246
    %249 = vset.pattern.permute.xlu0 10
    %250 = vperm.xlu0 %249, %v72
    %v251 = vpop.permute.xlu0 %250
    %vm252 = vcmp.eq.s32.totalorder %v75, %v251
    %vm253 = vcmp.eq.s32.totalorder %v76, %v251
    %254 = vset.pattern.permute.xlu0 10
    %255 = vperm.xlu0 %254, %v83
    %v256 = vpop.permute.xlu0 %255
    %vm257 = vcmp.eq.s32.totalorder %v256, 1
    %vm258 = vmand %vm252, %vm257
    %vm259 = vmand %vm253, %vm257
    %v260 = vsel %vm258, 1, 0
    %v261 = vsel %vm259, 1, 0
    %v262 = vcvt.s32.f32 %v260
    %v263 = vcvt.s32.f32 %v261
    %v264 = vadd.f32 %v247, %v262
    %v265 = vadd.f32 %v248, %v263
    %266 = vset.pattern.permute.xlu0 11
    %267 = vperm.xlu0 %266, %v72
    %v268 = vpop.permute.xlu0 %267
    %vm269 = vcmp.eq.s32.totalorder %v75, %v268
    %vm270 = vcmp.eq.s32.totalorder %v76, %v268
    %271 = vset.pattern.permute.xlu0 11
    %272 = vperm.xlu0 %271, %v83
    %v273 = vpop.permute.xlu0 %272
    %vm274 = vcmp.eq.s32.totalorder %v273, 1
    %vm275 = vmand %vm269, %vm274
    %vm276 = vmand %vm270, %vm274
    %v277 = vsel %vm275, 1, 0
    %v278 = vsel %vm276, 1, 0
    %v279 = vcvt.s32.f32 %v277
    %v280 = vcvt.s32.f32 %v278
    %v281 = vadd.f32 %v264, %v279
    %v282 = vadd.f32 %v265, %v280
    %283 = vset.pattern.permute.xlu0 12
    %284 = vperm.xlu0 %283, %v72
    %v285 = vpop.permute.xlu0 %284
    %vm286 = vcmp.eq.s32.totalorder %v75, %v285
    %vm287 = vcmp.eq.s32.totalorder %v76, %v285
    %288 = vset.pattern.permute.xlu0 12
    %289 = vperm.xlu0 %288, %v83
    %v290 = vpop.permute.xlu0 %289
    %vm291 = vcmp.eq.s32.totalorder %v290, 1
    %vm292 = vmand %vm286, %vm291
    %vm293 = vmand %vm287, %vm291
    %v294 = vsel %vm292, 1, 0
    %v295 = vsel %vm293, 1, 0
    %v296 = vcvt.s32.f32 %v294
    %v297 = vcvt.s32.f32 %v295
    %v298 = vadd.f32 %v281, %v296
    %v299 = vadd.f32 %v282, %v297
    %300 = vset.pattern.permute.xlu0 13
    %301 = vperm.xlu0 %300, %v72
    %v302 = vpop.permute.xlu0 %301
    %vm303 = vcmp.eq.s32.totalorder %v75, %v302
    %vm304 = vcmp.eq.s32.totalorder %v76, %v302
    %305 = vset.pattern.permute.xlu0 13
    %306 = vperm.xlu0 %305, %v83
    %v307 = vpop.permute.xlu0 %306
    %vm308 = vcmp.eq.s32.totalorder %v307, 1
    %vm309 = vmand %vm303, %vm308
    %vm310 = vmand %vm304, %vm308
    %v311 = vsel %vm309, 1, 0
    %v312 = vsel %vm310, 1, 0
    %v313 = vcvt.s32.f32 %v311
    %v314 = vcvt.s32.f32 %v312
    %v315 = vadd.f32 %v298, %v313
    %v316 = vadd.f32 %v299, %v314
    %317 = vset.pattern.permute.xlu0 14
    %318 = vperm.xlu0 %317, %v72
    %v319 = vpop.permute.xlu0 %318
    %vm320 = vcmp.eq.s32.totalorder %v75, %v319
    %vm321 = vcmp.eq.s32.totalorder %v76, %v319
    %322 = vset.pattern.permute.xlu0 14
    %323 = vperm.xlu0 %322, %v83
    %v324 = vpop.permute.xlu0 %323
    %vm325 = vcmp.eq.s32.totalorder %v324, 1
    %vm326 = vmand %vm320, %vm325
    %vm327 = vmand %vm321, %vm325
    %v328 = vsel %vm326, 1, 0
    %v329 = vsel %vm327, 1, 0
    %v330 = vcvt.s32.f32 %v328
    %v331 = vcvt.s32.f32 %v329
    %v332 = vadd.f32 %v315, %v330
    %v333 = vadd.f32 %v316, %v331
    %334 = vset.pattern.permute.xlu0 15
    %335 = vperm.xlu0 %334, %v72
    %v336 = vpop.permute.xlu0 %335
    %vm337 = vcmp.eq.s32.totalorder %v75, %v336
    %vm338 = vcmp.eq.s32.totalorder %v76, %v336
    %339 = vset.pattern.permute.xlu0 15
    %340 = vperm.xlu0 %339, %v83
    %v341 = vpop.permute.xlu0 %340
    %vm342 = vcmp.eq.s32.totalorder %v341, 1
    %vm343 = vmand %vm337, %vm342
    %vm344 = vmand %vm338, %vm342
    %v345 = vsel %vm343, 1, 0
    %v346 = vsel %vm344, 1, 0
    %v347 = vcvt.s32.f32 %v345
    %v348 = vcvt.s32.f32 %v346
    %v349 = vadd.f32 %v332, %v347
    %v350 = vadd.f32 %v333, %v348
    %s351 = sld [smem:[#allocation2]]
    // While loop
    $region38: #{tpu_custom_call.1} parent=1 // loop_pre_header
      _
    $region39: #{tpu_custom_call.1} parent=1 // loop_header
      %s353 = sphi %s351, %s355
      %p354 = scmp.ge.s32.totalorder %s353, 16
      %v358 = vphi %v349, %v1087
      %v359 = vphi %v350, %v1088
      %v360 = vphi %v72, %v1080
    $region40: #{tpu_custom_call.1} parent=1 // loop_header_branch
      %357 = sbr.rel (%p354) target = $region44
    $region41: #{tpu_custom_call.1} parent=1 // loop_body
      %v361 = vadd.f32 %v358, %v359
      %362 = vadd.xlane.f32.xlu0 %v361
      %v363 = vpop.xlane.xlu0 %362
      %v364 = vmax.f32 %v363, 1.0
      %v365 = vpack.c.bf16 %v358, %v358
      %v366 = vpack.c.bf16 %v359, %v359
      %v367 = vld [vmem:[#allocation6] sm:$0xf]
      %v368 = vld [vmem:[#allocation6 + $0x4] sm:$0xf]
      %v369 = vld [vmem:[#allocation6 + $0x8] sm:$0xf]
      %v370 = vld [vmem:[#allocation6 + $0xc] sm:$0xf]
      %v371 = vld [vmem:[#allocation6 + $0x10] sm:$0xf]
      %v372 = vld [vmem:[#allocation6 + $0x14] sm:$0xf]
      %v373 = vld [vmem:[#allocation6 + $0x18] sm:$0xf]
      %v374 = vld [vmem:[#allocation6 + $0x1c] sm:$0xf]
      %v375 = vld [vmem:[#allocation6 + $0x20] sm:$0xf]
      %v376 = vld [vmem:[#allocation6 + $0x24] sm:$0xf]
      %v377 = vld [vmem:[#allocation6 + $0x28] sm:$0xf]
      %v378 = vld [vmem:[#allocation6 + $0x2c] sm:$0xf]
      %v379 = vld [vmem:[#allocation6 + $0x30] sm:$0xf]
      %v380 = vld [vmem:[#allocation6 + $0x34] sm:$0xf]
      %v381 = vld [vmem:[#allocation6 + $0x38] sm:$0xf]
      %v382 = vld [vmem:[#allocation6 + $0x3c] sm:$0xf]
      %v383 = vld [vmem:[#allocation6 + $0x40] sm:$0xf]
      %v384 = vld [vmem:[#allocation6 + $0x44] sm:$0xf]
      %v385 = vld [vmem:[#allocation6 + $0x48] sm:$0xf]
      %v386 = vld [vmem:[#allocation6 + $0x4c] sm:$0xf]
      %v387 = vld [vmem:[#allocation6 + $0x50] sm:$0xf]
      %v388 = vld [vmem:[#allocation6 + $0x54] sm:$0xf]
      %v389 = vld [vmem:[#allocation6 + $0x58] sm:$0xf]
      %v390 = vld [vmem:[#allocation6 + $0x5c] sm:$0xf]
      %v391 = vld [vmem:[#allocation6 + $0x60] sm:$0xf]
      %v392 = vld [vmem:[#allocation6 + $0x64] sm:$0xf]
      %v393 = vld [vmem:[#allocation6 + $0x68] sm:$0xf]
      %v394 = vld [vmem:[#allocation6 + $0x6c] sm:$0xf]
      %v395 = vld [vmem:[#allocation6 + $0x70] sm:$0xf]
      %v396 = vld [vmem:[#allocation6 + $0x74] sm:$0xf]
      %v397 = vld [vmem:[#allocation6 + $0x78] sm:$0xf]
      %v398 = vld [vmem:[#allocation6 + $0x7c] sm:$0xf]
      %v431 = vunpack.c.l.b16 %v367
      %v432 = vunpack.c.l.b16 %v368
      %v433 = vunpack.c.l.b16 %v369
      %v434 = vunpack.c.l.b16 %v370
      %v435 = vunpack.c.l.b16 %v371
      %v436 = vunpack.c.l.b16 %v372
      %v437 = vunpack.c.l.b16 %v373
      %v438 = vunpack.c.l.b16 %v374
      %v439 = vunpack.c.l.b16 %v375
      %v440 = vunpack.c.l.b16 %v376
      %v441 = vunpack.c.l.b16 %v377
      %v442 = vunpack.c.l.b16 %v378
      %v443 = vunpack.c.l.b16 %v379
      %v444 = vunpack.c.l.b16 %v380
      %v445 = vunpack.c.l.b16 %v381
      %v446 = vunpack.c.l.b16 %v382
      %v447 = vunpack.c.l.b16 %v383
      %v448 = vunpack.c.l.b16 %v384
      %v449 = vunpack.c.l.b16 %v385
      %v450 = vunpack.c.l.b16 %v386
      %v451 = vunpack.c.l.b16 %v387
      %v452 = vunpack.c.l.b16 %v388
      %v453 = vunpack.c.l.b16 %v389
      %v454 = vunpack.c.l.b16 %v390
      %v455 = vunpack.c.l.b16 %v391
      %v456 = vunpack.c.l.b16 %v392
      %v457 = vunpack.c.l.b16 %v393
      %v458 = vunpack.c.l.b16 %v394
      %v459 = vunpack.c.l.b16 %v395
      %v460 = vunpack.c.l.b16 %v396
      %v461 = vunpack.c.l.b16 %v397
      %v462 = vunpack.c.l.b16 %v398
      %v463 = vpack.c.b16 %v432, %v431
      %v464 = vpack.c.b16 %v434, %v433
      %v465 = vpack.c.b16 %v436, %v435
      %v466 = vpack.c.b16 %v438, %v437
      %v467 = vpack.c.b16 %v440, %v439
      %v468 = vpack.c.b16 %v442, %v441
      %v469 = vpack.c.b16 %v444, %v443
      %v470 = vpack.c.b16 %v446, %v445
      %v471 = vpack.c.b16 %v448, %v447
      %v472 = vpack.c.b16 %v450, %v449
      %v473 = vpack.c.b16 %v452, %v451
      %v474 = vpack.c.b16 %v454, %v453
      %v475 = vpack.c.b16 %v456, %v455
      %v476 = vpack.c.b16 %v458, %v457
      %v477 = vpack.c.b16 %v460, %v459
      %v478 = vpack.c.b16 %v462, %v461
      %495 = vmatpush.bf16.msra.mxu0 %v470
      %496 = vmatpush.bf16.msra.mxu0 %v469
      %497 = vmatpush.bf16.msra.mxu0 %v468
      %498 = vmatpush.bf16.msra.mxu0 %v467
      %499 = vmatpush.bf16.msra.mxu0 %v466
      %500 = vmatpush.bf16.msra.mxu0 %v465
      %501 = vmatpush.bf16.msra.mxu0 %v464
      %502 = vmatpush.bf16.msra.mxu0 %v463
      %503 = vmatmul.bf16.gmra.mxu0 %v365
      %v504 = vpop.f32.mrf.mxu0
      %v505 = vadd.f32 0.0, %v504
      %v506 = vpop.f32.mrf.mxu0
      %507 = vdwg.mxu0
      %508 = vmatpush.bf16.msra.mxu0 %v478
      %509 = vmatpush.bf16.msra.mxu0 %v477
      %510 = vmatpush.bf16.msra.mxu0 %v476
      %511 = vmatpush.bf16.msra.mxu0 %v475
      %512 = vmatpush.bf16.msra.mxu0 %v474
      %513 = vmatpush.bf16.msra.mxu0 %v473
      %514 = vmatpush.bf16.msra.mxu0 %v472
      %515 = vmatpush.bf16.msra.mxu0 %v471
      %516 = vmatmul.bf16.gmra.mxu0 %v366
      %v517 = vpop.f32.mrf.mxu0
      %v518 = vadd.f32 %v505, %v517
      %v519 = vpop.f32.mrf.mxu0
      %520 = vdwg.mxu0
      %v521 = vrcp.pop %v364
      %v522 = vmul.f32 %v364, %v521
      %v523 = vsub.f32 1.0, %v522
      %v524 = vmul.f32 %v521, %v523
      %v525 = vadd.f32 %v521, %v524
      %vm526 = vweird.f32 %v364
      %vm527 = vweird.f32 %v521
      %vm528 = vmor %vm526, %vm527
      %v529 = vsel %vm528, %v521, %v525
      %v530 = vand.u32 2147483647, %v364
      %vm531 = vcmp.eq.f32.partialorder %v530, 8.507059e+37
      %v532 = vand.u32 %v364, 2147483648
      %v533 = vor.u32 1.1754944e-38, %v532
      %v534 = vsel %vm531, %v533, %v529
      %v535 = vmul.f32 %v518, %v534
      %v536 = vpack.c.bf16 %v535, %v535
      %v537 = vld [vmem:[#allocation8] sm:$0xff]
      %v538 = vld [vmem:[#allocation8 + $0x8] sm:$0xff]
      %v539 = vld [vmem:[#allocation8 + $0x10] sm:$0xff]
      %v540 = vld [vmem:[#allocation8 + $0x18] sm:$0xff]
      %v541 = vld [vmem:[#allocation8 + $0x20] sm:$0xff]
      %v542 = vld [vmem:[#allocation8 + $0x28] sm:$0xff]
      %v543 = vld [vmem:[#allocation8 + $0x30] sm:$0xff]
      %v544 = vld [vmem:[#allocation8 + $0x38] sm:$0xff]
      %v545 = vld [vmem:[#allocation8 + $0x40] sm:$0xff]
      %v546 = vld [vmem:[#allocation8 + $0x48] sm:$0xff]
      %v547 = vld [vmem:[#allocation8 + $0x50] sm:$0xff]
      %v548 = vld [vmem:[#allocation8 + $0x58] sm:$0xff]
      %v549 = vld [vmem:[#allocation8 + $0x60] sm:$0xff]
      %v550 = vld [vmem:[#allocation8 + $0x68] sm:$0xff]
      %v551 = vld [vmem:[#allocation8 + $0x70] sm:$0xff]
      %v552 = vld [vmem:[#allocation8 + $0x78] sm:$0xff]
      %v569 = vunpack.c.l.b16 %v537
      %v570 = vunpack.c.h.b16 %v537
      %v571 = vunpack.c.l.b16 %v538
      %v572 = vunpack.c.h.b16 %v538
      %v573 = vunpack.c.l.b16 %v539
      %v574 = vunpack.c.h.b16 %v539
      %v575 = vunpack.c.l.b16 %v540
      %v576 = vunpack.c.h.b16 %v540
      %v577 = vunpack.c.l.b16 %v541
      %v578 = vunpack.c.h.b16 %v541
      %v579 = vunpack.c.l.b16 %v542
      %v580 = vunpack.c.h.b16 %v542
      %v581 = vunpack.c.l.b16 %v543
      %v582 = vunpack.c.h.b16 %v543
      %v583 = vunpack.c.l.b16 %v544
      %v584 = vunpack.c.h.b16 %v544
      %v585 = vunpack.c.l.b16 %v545
      %v586 = vunpack.c.h.b16 %v545
      %v587 = vunpack.c.l.b16 %v546
      %v588 = vunpack.c.h.b16 %v546
      %v589 = vunpack.c.l.b16 %v547
      %v590 = vunpack.c.h.b16 %v547
      %v591 = vunpack.c.l.b16 %v548
      %v592 = vunpack.c.h.b16 %v548
      %v593 = vunpack.c.l.b16 %v549
      %v594 = vunpack.c.h.b16 %v549
      %v595 = vunpack.c.l.b16 %v550
      %v596 = vunpack.c.h.b16 %v550
      %v597 = vunpack.c.l.b16 %v551
      %v598 = vunpack.c.h.b16 %v551
      %v599 = vunpack.c.l.b16 %v552
      %v600 = vunpack.c.h.b16 %v552
      %v601 = vpack.c.b16 %v571, %v569
      %v602 = vpack.c.b16 %v572, %v570
      %v603 = vpack.c.b16 %v575, %v573
      %v604 = vpack.c.b16 %v576, %v574
      %v605 = vpack.c.b16 %v579, %v577
      %v606 = vpack.c.b16 %v580, %v578
      %v607 = vpack.c.b16 %v583, %v581
      %v608 = vpack.c.b16 %v584, %v582
      %v609 = vpack.c.b16 %v587, %v585
      %v610 = vpack.c.b16 %v588, %v586
      %v611 = vpack.c.b16 %v591, %v589
      %v612 = vpack.c.b16 %v592, %v590
      %v613 = vpack.c.b16 %v595, %v593
      %v614 = vpack.c.b16 %v596, %v594
      %v615 = vpack.c.b16 %v599, %v597
      %v616 = vpack.c.b16 %v600, %v598
      %633 = vmatpush.bf16.msra.mxu0 %v615
      %634 = vmatpush.bf16.msra.mxu0 %v613
      %635 = vmatpush.bf16.msra.mxu0 %v611
      %636 = vmatpush.bf16.msra.mxu0 %v609
      %637 = vmatpush.bf16.msra.mxu0 %v607
      %638 = vmatpush.bf16.msra.mxu0 %v605
      %639 = vmatpush.bf16.msra.mxu0 %v603
      %640 = vmatpush.bf16.msra.mxu0 %v601
      %641 = vmatmul.bf16.gmra.mxu0 %v536
      %v642 = vpop.f32.mrf.mxu0
      %v643 = vadd.f32 0.0, %v642
      %v644 = vpop.f32.mrf.mxu0
      %645 = vdwg.mxu0
      %646 = vmatpush.bf16.msra.mxu0 %v616
      %647 = vmatpush.bf16.msra.mxu0 %v614
      %648 = vmatpush.bf16.msra.mxu0 %v612
      %649 = vmatpush.bf16.msra.mxu0 %v610
      %650 = vmatpush.bf16.msra.mxu0 %v608
      %651 = vmatpush.bf16.msra.mxu0 %v606
      %652 = vmatpush.bf16.msra.mxu0 %v604
      %653 = vmatpush.bf16.msra.mxu0 %v602
      %654 = vmatmul.bf16.gmra.mxu0 %v536
      %v655 = vpop.f32.mrf.mxu0
      %v656 = vadd.f32 0.0, %v655
      %v657 = vpop.f32.mrf.mxu0
      %658 = vdwg.mxu0
      %v659 = vmax.f32 %v643, %v656
      %660 = vmax.xlane.f32.xlu0 %v659
      %v661 = vpop.xlane.xlu0 %660
      %v662 = vsub.f32 %v643, %v661
      %v663 = vsub.f32 %v656, %v661
      %v664 = vmul.f32 %v662, 1.442695
      %v665 = vpow.pop %v664
      %v666 = vmul.f32 %v663, 1.442695
      %v667 = vpow.pop %v666
      %v668 = vadd.f32 %v665, %v667
      %669 = vadd.xlane.f32.xlu0 %v668
      %v670 = vpop.xlane.xlu0 %669
      %v671 = vmul.f32 %v670, 0.9
      %v672 = vmin.f32 %v643, %v656
      %673 = vmin.xlane.f32.xlu0 %v672
      %v674 = vpop.xlane.xlu0 %673
      %v675 = vsub.f32 %v674, 1.0
      %v676 = vadd.f32 %v675, %v661
      %v677 = vmul.f32 %v676, 0.5
      %vm678 = vcmp.gt.f32.partialorder %v643, %v677
      %vm679 = vcmp.gt.f32.partialorder %v656, %v677
      %v680 = vsel %vm678, %v665, 0.0
      %v681 = vsel %vm679, %v667, 0.0
      %v682 = vadd.f32 %v680, %v681
      %683 = vadd.xlane.f32.xlu0 %v682
      %v684 = vpop.xlane.xlu0 %683
      %vm685 = vcmp.gt.f32.partialorder %v684, %v671
      %v686 = vsel %vm685, %v677, %v675
      %v687 = vsel %vm685, %v661, %v677
      %v688 = vadd.f32 %v686, %v687
      %v689 = vmul.f32 %v688, 0.5
      %vm690 = vcmp.gt.f32.partialorder %v643, %v689
      %vm691 = vcmp.gt.f32.partialorder %v656, %v689
      %v692 = vsel %vm690, %v665, 0.0
      %v693 = vsel %vm691, %v667, 0.0
      %v694 = vadd.f32 %v692, %v693
      %695 = vadd.xlane.f32.xlu0 %v694
      %v696 = vpop.xlane.xlu0 %695
      %vm697 = vcmp.gt.f32.partialorder %v696, %v671
      %v698 = vsel %vm697, %v689, %v686
      %v699 = vsel %vm697, %v687, %v689
      %v700 = vadd.f32 %v698, %v699
      %v701 = vmul.f32 %v700, 0.5
      %vm702 = vcmp.gt.f32.partialorder %v643, %v701
      %vm703 = vcmp.gt.f32.partialorder %v656, %v701
      %v704 = vsel %vm702, %v665, 0.0
      %v705 = vsel %vm703, %v667, 0.0
      %v706 = vadd.f32 %v704, %v705
      %707 = vadd.xlane.f32.xlu0 %v706
      %v708 = vpop.xlane.xlu0 %707
      %vm709 = vcmp.gt.f32.partialorder %v708, %v671
      %v710 = vsel %vm709, %v701, %v698
      %v711 = vsel %vm709, %v699, %v701
      %v712 = vadd.f32 %v710, %v711
      %v713 = vmul.f32 %v712, 0.5
      %vm714 = vcmp.gt.f32.partialorder %v643, %v713
      %vm715 = vcmp.gt.f32.partialorder %v656, %v713
      %v716 = vsel %vm714, %v665, 0.0
      %v717 = vsel %vm715, %v667, 0.0
      %v718 = vadd.f32 %v716, %v717
      %719 = vadd.xlane.f32.xlu0 %v718
      %v720 = vpop.xlane.xlu0 %719
      %vm721 = vcmp.gt.f32.partialorder %v720, %v671
      %v722 = vsel %vm721, %v713, %v710
      %v723 = vsel %vm721, %v711, %v713
      %v724 = vadd.f32 %v722, %v723
      %v725 = vmul.f32 %v724, 0.5
      %vm726 = vcmp.gt.f32.partialorder %v643, %v725
      %vm727 = vcmp.gt.f32.partialorder %v656, %v725
      %v728 = vsel %vm726, %v665, 0.0
      %v729 = vsel %vm727, %v667, 0.0
      %v730 = vadd.f32 %v728, %v729
      %731 = vadd.xlane.f32.xlu0 %v730
      %v732 = vpop.xlane.xlu0 %731
      %vm733 = vcmp.gt.f32.partialorder %v732, %v671
      %v734 = vsel %vm733, %v725, %v722
      %v735 = vsel %vm733, %v723, %v725
      %v736 = vadd.f32 %v734, %v735
      %v737 = vmul.f32 %v736, 0.5
      %vm738 = vcmp.gt.f32.partialorder %v643, %v737
      %vm739 = vcmp.gt.f32.partialorder %v656, %v737
      %v740 = vsel %vm738, %v665, 0.0
      %v741 = vsel %vm739, %v667, 0.0
      %v742 = vadd.f32 %v740, %v741
      %743 = vadd.xlane.f32.xlu0 %v742
      %v744 = vpop.xlane.xlu0 %743
      %vm745 = vcmp.gt.f32.partialorder %v744, %v671
      %v746 = vsel %vm745, %v737, %v734
      %v747 = vsel %vm745, %v735, %v737
      %v748 = vadd.f32 %v746, %v747
      %v749 = vmul.f32 %v748, 0.5
      %vm750 = vcmp.gt.f32.partialorder %v643, %v749
      %vm751 = vcmp.gt.f32.partialorder %v656, %v749
      %v752 = vsel %vm750, %v665, 0.0
      %v753 = vsel %vm751, %v667, 0.0
      %v754 = vadd.f32 %v752, %v753
      %755 = vadd.xlane.f32.xlu0 %v754
      %v756 = vpop.xlane.xlu0 %755
      %vm757 = vcmp.gt.f32.partialorder %v756, %v671
      %v758 = vsel %vm757, %v749, %v746
      %v759 = vsel %vm757, %v747, %v749
      %v760 = vadd.f32 %v758, %v759
      %v761 = vmul.f32 %v760, 0.5
      %vm762 = vcmp.gt.f32.partialorder %v643, %v761
      %vm763 = vcmp.gt.f32.partialorder %v656, %v761
      %v764 = vsel %vm762, %v665, 0.0
      %v765 = vsel %vm763, %v667, 0.0
      %v766 = vadd.f32 %v764, %v765
      %767 = vadd.xlane.f32.xlu0 %v766
      %v768 = vpop.xlane.xlu0 %767
      %vm769 = vcmp.gt.f32.partialorder %v768, %v671
      %v770 = vsel %vm769, %v761, %v758
      %v771 = vsel %vm769, %v759, %v761
      %v772 = vadd.f32 %v770, %v771
      %v773 = vmul.f32 %v772, 0.5
      %vm774 = vcmp.gt.f32.partialorder %v643, %v773
      %vm775 = vcmp.gt.f32.partialorder %v656, %v773
      %v776 = vsel %vm774, %v665, 0.0
      %v777 = vsel %vm775, %v667, 0.0
      %v778 = vadd.f32 %v776, %v777
      %779 = vadd.xlane.f32.xlu0 %v778
      %v780 = vpop.xlane.xlu0 %779
      %vm781 = vcmp.gt.f32.partialorder %v780, %v671
      %v782 = vsel %vm781, %v773, %v770
      %v783 = vsel %vm781, %v771, %v773
      %v784 = vadd.f32 %v782, %v783
      %v785 = vmul.f32 %v784, 0.5
      %vm786 = vcmp.gt.f32.partialorder %v643, %v785
      %vm787 = vcmp.gt.f32.partialorder %v656, %v785
      %v788 = vsel %vm786, %v665, 0.0
      %v789 = vsel %vm787, %v667, 0.0
      %v790 = vadd.f32 %v788, %v789
      %791 = vadd.xlane.f32.xlu0 %v790
      %v792 = vpop.xlane.xlu0 %791
      %vm793 = vcmp.gt.f32.partialorder %v792, %v671
      %v794 = vsel %vm793, %v785, %v782
      %v795 = vsel %vm793, %v783, %v785
      %v796 = vadd.f32 %v794, %v795
      %v797 = vmul.f32 %v796, 0.5
      %vm798 = vcmp.gt.f32.partialorder %v643, %v797
      %vm799 = vcmp.gt.f32.partialorder %v656, %v797
      %v800 = vsel %vm798, %v665, 0.0
      %v801 = vsel %vm799, %v667, 0.0
      %v802 = vadd.f32 %v800, %v801
      %803 = vadd.xlane.f32.xlu0 %v802
      %v804 = vpop.xlane.xlu0 %803
      %vm805 = vcmp.gt.f32.partialorder %v804, %v671
      %v806 = vsel %vm805, %v797, %v794
      %v807 = vsel %vm805, %v795, %v797
      %v808 = vadd.f32 %v806, %v807
      %v809 = vmul.f32 %v808, 0.5
      %vm810 = vcmp.gt.f32.partialorder %v643, %v809
      %vm811 = vcmp.gt.f32.partialorder %v656, %v809
      %v812 = vsel %vm810, %v665, 0.0
      %v813 = vsel %vm811, %v667, 0.0
      %v814 = vadd.f32 %v812, %v813
      %815 = vadd.xlane.f32.xlu0 %v814
      %v816 = vpop.xlane.xlu0 %815
      %vm817 = vcmp.gt.f32.partialorder %v816, %v671
      %v818 = vsel %vm817, %v809, %v806
      %v819 = vsel %vm817, %v807, %v809
      %v820 = vadd.f32 %v818, %v819
      %v821 = vmul.f32 %v820, 0.5
      %vm822 = vcmp.gt.f32.partialorder %v643, %v821
      %vm823 = vcmp.gt.f32.partialorder %v656, %v821
      %v824 = vsel %vm822, %v665, 0.0
      %v825 = vsel %vm823, %v667, 0.0
      %v826 = vadd.f32 %v824, %v825
      %827 = vadd.xlane.f32.xlu0 %v826
      %v828 = vpop.xlane.xlu0 %827
      %vm829 = vcmp.gt.f32.partialorder %v828, %v671
      %v830 = vsel %vm829, %v821, %v818
      %v831 = vsel %vm829, %v819, %v821
      %v832 = vadd.f32 %v830, %v831
      %v833 = vmul.f32 %v832, 0.5
      %vm834 = vcmp.gt.f32.partialorder %v643, %v833
      %vm835 = vcmp.gt.f32.partialorder %v656, %v833
      %v836 = vsel %vm834, %v665, 0.0
      %v837 = vsel %vm835, %v667, 0.0
      %v838 = vadd.f32 %v836, %v837
      %839 = vadd.xlane.f32.xlu0 %v838
      %v840 = vpop.xlane.xlu0 %839
      %vm841 = vcmp.gt.f32.partialorder %v840, %v671
      %v842 = vsel %vm841, %v833, %v830
      %v843 = vsel %vm841, %v831, %v833
      %v844 = vadd.f32 %v842, %v843
      %v845 = vmul.f32 %v844, 0.5
      %vm846 = vcmp.gt.f32.partialorder %v643, %v845
      %vm847 = vcmp.gt.f32.partialorder %v656, %v845
      %v848 = vsel %vm846, %v665, 0.0
      %v849 = vsel %vm847, %v667, 0.0
      %v850 = vadd.f32 %v848, %v849
      %851 = vadd.xlane.f32.xlu0 %v850
      %v852 = vpop.xlane.xlu0 %851
      %vm853 = vcmp.gt.f32.partialorder %v852, %v671
      %v854 = vsel %vm853, %v845, %v842
      %v855 = vsel %vm853, %v843, %v845
      %v856 = vadd.f32 %v854, %v855
      %v857 = vmul.f32 %v856, 0.5
      %vm858 = vcmp.gt.f32.partialorder %v643, %v857
      %vm859 = vcmp.gt.f32.partialorder %v656, %v857
      %v860 = vsel %vm858, %v665, 0.0
      %v861 = vsel %vm859, %v667, 0.0
      %v862 = vadd.f32 %v860, %v861
      %863 = vadd.xlane.f32.xlu0 %v862
      %v864 = vpop.xlane.xlu0 %863
      %vm865 = vcmp.gt.f32.partialorder %v864, %v671
      %v866 = vsel %vm865, %v857, %v854
      %v867 = vsel %vm865, %v855, %v857
      %v868 = vadd.f32 %v866, %v867
      %v869 = vmul.f32 %v868, 0.5
      %vm870 = vcmp.gt.f32.partialorder %v643, %v869
      %vm871 = vcmp.gt.f32.partialorder %v656, %v869
      %v872 = vsel %vm870, %v665, 0.0
      %v873 = vsel %vm871, %v667, 0.0
      %v874 = vadd.f32 %v872, %v873
      %875 = vadd.xlane.f32.xlu0 %v874
      %v876 = vpop.xlane.xlu0 %875
      %vm877 = vcmp.gt.f32.partialorder %v876, %v671
      %v878 = vsel %vm877, %v869, %v866
      %v879 = vsel %vm877, %v867, %v869
      %v880 = vadd.f32 %v878, %v879
      %v881 = vmul.f32 %v880, 0.5
      %vm882 = vcmp.gt.f32.partialorder %v643, %v881
      %vm883 = vcmp.gt.f32.partialorder %v656, %v881
      %v884 = vsel %vm882, %v665, 0.0
      %v885 = vsel %vm883, %v667, 0.0
      %v886 = vadd.f32 %v884, %v885
      %887 = vadd.xlane.f32.xlu0 %v886
      %v888 = vpop.xlane.xlu0 %887
      %vm889 = vcmp.gt.f32.partialorder %v888, %v671
      %v890 = vsel %vm889, %v881, %v878
      %v891 = vsel %vm889, %v879, %v881
      %v892 = vadd.f32 %v890, %v891
      %v893 = vmul.f32 %v892, 0.5
      %vm894 = vcmp.gt.f32.partialorder %v643, %v893
      %vm895 = vcmp.gt.f32.partialorder %v656, %v893
      %v896 = vsel %vm894, %v665, 0.0
      %v897 = vsel %vm895, %v667, 0.0
      %v898 = vadd.f32 %v896, %v897
      %899 = vadd.xlane.f32.xlu0 %v898
      %v900 = vpop.xlane.xlu0 %899
      %vm901 = vcmp.gt.f32.partialorder %v900, %v671
      %v902 = vsel %vm901, %v893, %v890
      %v903 = vsel %vm901, %v891, %v893
      %v904 = vadd.f32 %v902, %v903
      %v905 = vmul.f32 %v904, 0.5
      %vm906 = vcmp.gt.f32.partialorder %v643, %v905
      %vm907 = vcmp.gt.f32.partialorder %v656, %v905
      %v908 = vsel %vm906, %v665, 0.0
      %v909 = vsel %vm907, %v667, 0.0
      %v910 = vadd.f32 %v908, %v909
      %911 = vadd.xlane.f32.xlu0 %v910
      %v912 = vpop.xlane.xlu0 %911
      %vm913 = vcmp.gt.f32.partialorder %v912, %v671
      %v914 = vsel %vm913, %v905, %v902
      %v915 = vsel %vm913, %v903, %v905
      %v916 = vadd.f32 %v914, %v915
      %v917 = vmul.f32 %v916, 0.5
      %vm918 = vcmp.gt.f32.partialorder %v643, %v917
      %vm919 = vcmp.gt.f32.partialorder %v656, %v917
      %v920 = vsel %vm918, %v665, 0.0
      %v921 = vsel %vm919, %v667, 0.0
      %v922 = vadd.f32 %v920, %v921
      %923 = vadd.xlane.f32.xlu0 %v922
      %v924 = vpop.xlane.xlu0 %923
      %vm925 = vcmp.gt.f32.partialorder %v924, %v671
      %v926 = vsel %vm925, %v917, %v914
      %v927 = vsel %vm925, %v915, %v917
      %v928 = vadd.f32 %v926, %v927
      %v929 = vmul.f32 %v928, 0.5
      %vm930 = vcmp.gt.f32.partialorder %v643, %v929
      %vm931 = vcmp.gt.f32.partialorder %v656, %v929
      %v932 = vsel %vm930, %v665, 0.0
      %v933 = vsel %vm931, %v667, 0.0
      %v934 = vadd.f32 %v932, %v933
      %935 = vadd.xlane.f32.xlu0 %v934
      %v936 = vpop.xlane.xlu0 %935
      %vm937 = vcmp.gt.f32.partialorder %v936, %v671
      %v938 = vsel %vm937, %v929, %v926
      %v939 = vsel %vm937, %v927, %v929
      %v940 = vadd.f32 %v938, %v939
      %v941 = vmul.f32 %v940, 0.5
      %vm942 = vcmp.gt.f32.partialorder %v643, %v941
      %vm943 = vcmp.gt.f32.partialorder %v656, %v941
      %v944 = vsel %vm942, %v665, 0.0
      %v945 = vsel %vm943, %v667, 0.0
      %v946 = vadd.f32 %v944, %v945
      %947 = vadd.xlane.f32.xlu0 %v946
      %v948 = vpop.xlane.xlu0 %947
      %vm949 = vcmp.gt.f32.partialorder %v948, %v671
      %v950 = vsel %vm949, %v941, %v938
      %v951 = vsel %vm949, %v939, %v941
      %v952 = vadd.f32 %v950, %v951
      %v953 = vmul.f32 %v952, 0.5
      %vm954 = vcmp.gt.f32.partialorder %v643, %v953
      %vm955 = vcmp.gt.f32.partialorder %v656, %v953
      %v956 = vsel %vm954, %v665, 0.0
      %v957 = vsel %vm955, %v667, 0.0
      %v958 = vadd.f32 %v956, %v957
      %959 = vadd.xlane.f32.xlu0 %v958
      %v960 = vpop.xlane.xlu0 %959
      %vm961 = vcmp.gt.f32.partialorder %v960, %v671
      %v962 = vsel %vm961, %v953, %v950
      %v963 = vsel %vm961, %v951, %v953
      %v964 = vadd.f32 %v962, %v963
      %v965 = vmul.f32 %v964, 0.5
      %vm966 = vcmp.gt.f32.partialorder %v643, %v965
      %vm967 = vcmp.gt.f32.partialorder %v656, %v965
      %v968 = vsel %vm966, %v665, 0.0
      %v969 = vsel %vm967, %v667, 0.0
      %v970 = vadd.f32 %v968, %v969
      %971 = vadd.xlane.f32.xlu0 %v970
      %v972 = vpop.xlane.xlu0 %971
      %vm973 = vcmp.gt.f32.partialorder %v972, %v671
      %v974 = vsel %vm973, %v965, %v962
      %v975 = vsel %vm973, %v963, %v965
      %v976 = vadd.f32 %v974, %v975
      %v977 = vmul.f32 %v976, 0.5
      %vm978 = vcmp.gt.f32.partialorder %v643, %v977
      %vm979 = vcmp.gt.f32.partialorder %v656, %v977
      %v980 = vsel %vm978, %v665, 0.0
      %v981 = vsel %vm979, %v667, 0.0
      %v982 = vadd.f32 %v980, %v981
      %983 = vadd.xlane.f32.xlu0 %v982
      %v984 = vpop.xlane.xlu0 %983
      %vm985 = vcmp.gt.f32.partialorder %v984, %v671
      %v986 = vsel %vm985, %v977, %v974
      %v987 = vsel %vm985, %v975, %v977
      %v988 = vadd.f32 %v986, %v987
      %v989 = vmul.f32 %v988, 0.5
      %vm990 = vcmp.gt.f32.partialorder %v643, %v989
      %vm991 = vcmp.gt.f32.partialorder %v656, %v989
      %v992 = vsel %vm990, %v665, 0.0
      %v993 = vsel %vm991, %v667, 0.0
      %v994 = vadd.f32 %v992, %v993
      %995 = vadd.xlane.f32.xlu0 %v994
      %v996 = vpop.xlane.xlu0 %995
      %vm997 = vcmp.gt.f32.partialorder %v996, %v671
      %v998 = vsel %vm997, %v989, %v986
      %v999 = vsel %vm997, %v987, %v989
      %v1000 = vadd.f32 %v998, %v999
      %v1001 = vmul.f32 %v1000, 0.5
      %vm1002 = vcmp.gt.f32.partialorder %v643, %v1001
      %vm1003 = vcmp.gt.f32.partialorder %v656, %v1001
      %v1004 = vsel %vm1002, %v665, 0.0
      %v1005 = vsel %vm1003, %v667, 0.0
      %v1006 = vadd.f32 %v1004, %v1005
      %1007 = vadd.xlane.f32.xlu0 %v1006
      %v1008 = vpop.xlane.xlu0 %1007
      %vm1009 = vcmp.gt.f32.partialorder %v1008, %v671
      %v1010 = vsel %vm1009, %v1001, %v998
      %v1011 = vsel %vm1009, %v999, %v1001
      %v1012 = vadd.f32 %v1010, %v1011
      %v1013 = vmul.f32 %v1012, 0.5
      %vm1014 = vcmp.gt.f32.partialorder %v643, %v1013
      %vm1015 = vcmp.gt.f32.partialorder %v656, %v1013
      %v1016 = vsel %vm1014, %v665, 0.0
      %v1017 = vsel %vm1015, %v667, 0.0
      %v1018 = vadd.f32 %v1016, %v1017
      %1019 = vadd.xlane.f32.xlu0 %v1018
      %v1020 = vpop.xlane.xlu0 %1019
      %vm1021 = vcmp.gt.f32.partialorder %v1020, %v671
      %v1022 = vsel %vm1021, %v1013, %v1010
      %v1023 = vsel %vm1021, %v1011, %v1013
      %v1024 = vadd.f32 %v1022, %v1023
      %v1025 = vmul.f32 %v1024, 0.5
      %vm1026 = vcmp.gt.f32.partialorder %v643, %v1025
      %vm1027 = vcmp.gt.f32.partialorder %v656, %v1025
      %v1028 = vsel %vm1026, %v665, 0.0
      %v1029 = vsel %vm1027, %v667, 0.0
      %v1030 = vadd.f32 %v1028, %v1029
      %1031 = vadd.xlane.f32.xlu0 %v1030
      %v1032 = vpop.xlane.xlu0 %1031
      %vm1033 = vcmp.gt.f32.partialorder %v1032, %v671
      %v1034 = vsel %vm1033, %v1025, %v1022
      %vm1035 = vcmp.gt.f32.partialorder %v643, %v1034
      %vm1036 = vcmp.gt.f32.partialorder %v656, %v1034
      %s1037 = smul.u32 %s353, 2
      %s1038 = smul.addr %s1037, 8
      %s1039 = scalar_lea.vmem [#allocation3], %s1038
      %v1040 = vld [vmem:[%s1039] sm:$0xff]
      %v1041 = vld [vmem:[%s1039 + $0x8] sm:$0xff]
      %v1042 = vmul.f32 %v643, 1.4285715
      %v1043 = vmul.f32 %v656, 1.4285715
      %v1044 = vadd.f32 %v1042, %v1040
      %v1045 = vadd.f32 %v1043, %v1041
      %v1046 = vsel %vm1035, %v1044, -1e+30
      %v1047 = vsel %vm1036, %v1045, -1e+30
      %v1048 = vmax.f32 %v1046, %v1047
      %1049 = vmax.xlane.f32.xlu0 %v1048
      %v1050 = vpop.xlane.xlu0 %1049
      %vm1051 = vcmp.ge.f32.partialorder %v1046, %v1050
      %vm1052 = vcmp.ge.f32.partialorder %v1047, %v1050
      %v1053 = vsel %vm1051, %v75, 256
      %v1054 = vsel %vm1052, %v76, 256
      %vm1055 = vcmp.lt.s32.totalorder %v1053, %v1054
      %v1056 = vsel %vm1055, %v1053, %v1054
      %v1057 = vand.u32 %v1056, 65535
      %v1058 = vshra.s32 %v1056, 16
      %v1059 = vcvt.s32.f32 %v1057
      %v1060 = vcvt.s32.f32 %v1058
      %1061 = vmin.xlane.f32.xlu0 %v1060
      %v1062 = vpop.xlane.xlu0 %1061
      %vm1063 = vcmp.eq.f32.partialorder %v1060, %v1062
      %v1064 = vsel %vm1063, %v1059, inf
      %1065 = vmin.xlane.f32.xlu0 %v1064
      %v1066 = vpop.xlane.xlu0 %1065
      %v1067 = vcvt.f32.s32 %v1066
      %v1068 = vcvt.f32.s32 %v1062
      %v1069 = vshll.u32 %v1068, 16
      %v1070 = vadd.s32 %v1069, %v1067
      %v1071 = vstv %s353
      %vm1072 = vcmp.ge.s32.totalorder %v1071, %v73
      %vm1073 = vcmp.eq.s32.totalorder %v75, %v1071
      %v1074 = vsel %vm1072, 1, 0
      %1075 = vset.pattern.permute.xlu0 0
      %1076 = vperm.xlu0 %1075, %v1074
      %v1077 = vpop.permute.xlu0 %1076
      %vm1078 = vcmp.eq.s32.totalorder %v1077, 1
      %vm1079 = vmand %vm1073, %vm1078
      %v1080 = vsel %vm1079, %v1070, %v360
      %vm1081 = vcmp.eq.s32.totalorder %v75, %v1070
      %vm1082 = vcmp.eq.s32.totalorder %v76, %v1070
      %vm1083 = vmand %vm1078, %vm1081
      %vm1084 = vmand %vm1078, %vm1082
      %v1085 = vsel %vm1083, 1.0, 0.0
      %v1086 = vsel %vm1084, 1.0, 0.0
      %v1087 = vadd.f32 %v358, %v1085
      %v1088 = vadd.f32 %v359, %v1086
    $region42: #{tpu_custom_call.1} parent=1 // loop_footer
      %s355 = sadd.s32 %s353, 1
    $region43: #{tpu_custom_call.1} parent=1 // loop_footer_branch
      %352 = sbr.rel target = $region39
    $region44: #{tpu_custom_call.1} parent=1 // loop_exit
      _
    %vm1089 = vcmask 130048
    %1090 = vst.msk [vmem:[#allocation9] sm:$0xff] %vm1089, %v360
    // Predicated region
    $region45: #{tpu_custom_call.1} parent=1 // pred_check
      _
    $region46: #{tpu_custom_call.1} parent=1 // pred_check_branch
      %1092 = sbr.rel (0) target = $region48
    $region47: #{tpu_custom_call.1} parent=1 // pred_region
      %1094 = vsyncadd [#allocation5], 0
      %s1096 = sshll.u32 [#allocation9], 4
      %s1097 = int_to_ptr.vmem [resolvable:$true] %s1096
      %s1098 = sshll.u32 %s6, 4
      %s1099 = int_to_ptr.hbm [resolvable:$true] %s1098
      %1101 = dma.vmem_to_hbm [thread:$0]  %s1097, 128, %s1099, [#allocation5]
    $region48: #{tpu_custom_call.1} parent=1 // pred_fallthru
      _
    // Predicated region
    $region49: #{tpu_custom_call.1} parent=1 // pred_check
      _
    $region50: #{tpu_custom_call.1} parent=1 // pred_check_branch
      %1103 = sbr.rel (0) target = $region52
    $region51: #{tpu_custom_call.1} parent=1 // pred_region
      %1105 = dma.done [#allocation5], 128
    $region52: #{tpu_custom_call.1} parent=1 // pred_fallthru
      _
    %1106 = vsyncpa [#allocation4], 1
    %1107 = vsyncpa [#allocation7], 1
    %1108 = vsyncpa [#allocation5], 1

</llo_original>
